<compile_context>
chip_gen: v7x
topology: tpu7x:2x2x1
jax: 0.10.0
libtpu: 0.0.40
codegen_flags: <defaults>
</compile_context>

<pallas_src>
import jax
import jax.numpy as jnp
from jax.experimental import pallas as pl
from jax.experimental.pallas import tpu as pltpu


def eqfusion_kernel(x_ref, inj1_ref, inj2_ref, res1_ref, res2_ref,
                    w1_ref, w2_ref, wi_ref, w3_ref, bias_ref, o_ref):
    f32 = jnp.float32
    cdt = w1_ref.dtype  # MXU operand dtype (bf16)

    # conv1 + conv2 with folded bias:  f1 + f2 = inj1@W1t + inj2@W2t + (b1+b2)
    f12 = (jnp.dot(inj1_ref[...].astype(cdt), w1_ref[...], preferred_element_type=f32)
           + jnp.dot(inj2_ref[...].astype(cdt), w2_ref[...], preferred_element_type=f32)
           + bias_ref[0:1, :])

    # conv_inject on the summed residuals (its bias is folded into b3_eff).
    res = res1_ref[...] + res2_ref[...]                      # f32 add, no round-trip
    fi = jnp.dot(res.astype(cdt), wi_ref[...], preferred_element_type=f32)

    # Gated fusion in f32 (x never touches the MXU; keep its full precision).
    h = x_ref[...] * f12 + fi

    # conv3 with b3_eff = b3 + b_inj @ W3^T.
    out = jnp.dot(h.astype(cdt), w3_ref[...], preferred_element_type=f32) + bias_ref[1:2, :]
    o_ref[...] = out.astype(o_ref.dtype)


def eqfusion_forward(x, inj_b1, inj_b2, res_b1, res_b2, params, *,
                     tm=None, out_dtype=jnp.bfloat16, compute_dtype=jnp.bfloat16,
                     single_buffer_residents=True):
    """All activations are (M, dim) row-major f32 (passed through unchanged).
    params holds PyTorch-layout Linear parameters: w* is (out, in), b* is (out,)."""
    M, out_dim = x.shape
    b1_dim = inj_b1.shape[1]
    b2_dim = inj_b2.shape[1]

    # Pad the out_dim axis up to a lane-dense multiple of 128 (zero padding is
    # exact: padded weight columns / bias entries are zero, padded x columns
    # are zero, so padded output columns are zero and get sliced off).
    Dp = ((out_dim + 127) // 128) * 128
    pad_n = Dp - out_dim

    def pad_cols(a):
        return a if pad_n == 0 else jnp.pad(a, ((0, 0), (0, pad_n)))

    def pad_both(a):
        return a if pad_n == 0 else jnp.pad(a, ((0, pad_n), (0, pad_n)))

    # Activations: NO dtype cast in the wrapper (kernel reads f32 directly).
    xs = pad_cols(x)
    r1 = pad_cols(res_b1)
    r2 = pad_cols(res_b2)

    cdt = compute_dtype
    # Pre-transposed (in, out) weights, padded on the output axis, cast once.
    w1t = pad_cols(params["w1"].T).astype(cdt)     # (b1_dim, Dp)
    w2t = pad_cols(params["w2"].T).astype(cdt)     # (b2_dim, Dp)
    wit = pad_both(params["w_inj"].T).astype(cdt)  # (Dp, Dp)
    w3t = pad_both(params["w3"].T).astype(cdt)     # (Dp, Dp)

    # Bias folds (exact algebra in f32, done once on host-side XLA).
    b12 = (params["b1"] + params["b2"]).astype(jnp.float32)
    b3e = (params["b3"] + params["b_inj"] @ params["w3"].T).astype(jnp.float32)
    biases = pad_cols(jnp.stack([b12, b3e]))       # (2, Dp) f32, one resident array

    # Row-tile size: >= 2 grid steps so both v7x TensorCores get work; 512 at
    # larger M (sweep 512 / 1024 at production sizes, VMEM permitting).
    if tm is None:
        if M > 512:
            tm = 512
        else:
            tm = max(8, ((M + 1) // 2 + 7) // 8 * 8)
    grid = (pl.cdiv(M, tm),)

    def row_spec(d):
        return pl.BlockSpec((tm, d), lambda i: (i, 0))

    def resident(shape):
        if single_buffer_residents:
            return pl.BlockSpec(shape, lambda i: (0, 0), pipeline_mode=pl.Buffered(1))
        return pl.BlockSpec(shape, lambda i: (0, 0))

    # Cost estimate (advisory, for XLA scheduling around the custom call).
    flops = 2 * M * Dp * (b1_dim + b2_dim + 2 * Dp)
    bytes_accessed = int(
        sum(int(a.size) * a.dtype.itemsize
            for a in (xs, inj_b1, inj_b2, r1, r2, w1t, w2t, wit, w3t, biases))
        + M * Dp * jnp.dtype(out_dtype).itemsize)

    # Honest VMEM accounting: streamed tiles x2 buffers, residents x1 (or x2),
    # f32 temporaries, +25% headroom, no 32 MiB floor, <= 48 MiB (v7x-safe).
    act_bytes = x.dtype.itemsize
    stream_bytes = tm * (3 * Dp + b1_dim + b2_dim) * act_bytes          # x, r1, r2, inj1, inj2
    out_bytes = tm * Dp * jnp.dtype(out_dtype).itemsize
    weight_bytes = (b1_dim + b2_dim + 2 * Dp) * Dp * jnp.dtype(cdt).itemsize + 2 * Dp * 4
    n_res_bufs = 1 if single_buffer_residents else 2
    tmp_bytes = 4 * tm * Dp * 4                                         # f12, fi, h, casts
    need = 2 * (stream_bytes + out_bytes) + n_res_bufs * weight_bytes + tmp_bytes
    vmem_limit = int(min(max(need + need // 4, 4 * 1024 * 1024), 48 * 1024 * 1024))

    out = pl.pallas_call(
        eqfusion_kernel,
        out_shape=jax.ShapeDtypeStruct((M, Dp), out_dtype),
        grid=grid,
        in_specs=[
            row_spec(Dp),                 # x (f32, gating only)
            row_spec(b1_dim),             # injection_feature_branch1 (f32)
            row_spec(b2_dim),             # injection_feature_branch2 (f32)
            row_spec(Dp),                 # residual_feature_branch1 (f32)
            row_spec(Dp),                 # residual_feature_branch2 (f32)
            resident((b1_dim, Dp)),       # W1^T (in, out), bf16, VMEM-resident
            resident((b2_dim, Dp)),       # W2^T
            resident((Dp, Dp)),           # W_inject^T
            resident((Dp, Dp)),           # W3^T
            resident((2, Dp)),            # [b1+b2 ; b3 + b_inj@W3^T] (f32)
        ],
        out_specs=row_spec(Dp),
        compiler_params=pltpu.CompilerParams(
            dimension_semantics=("parallel",),
            vmem_limit_bytes=vmem_limit),
        cost_estimate=pl.CostEstimate(flops=flops, transcendentals=0,
                                      bytes_accessed=bytes_accessed),
    )(xs, inj_b1, inj_b2, r1, r2, w1t, w2t, wit, w3t, biases)

    return out[:, :out_dim] if pad_n else out


def reference_forward(x, inj_b1, inj_b2, res_b1, res_b2, params):
    f1 = inj_b1 @ params["w1"].T + params["b1"]
    f2 = inj_b2 @ params["w2"].T + params["b2"]
    fi = (res_b1 + res_b2) @ params["w_inj"].T + params["b_inj"]
    return (x * f1 + x * f2 + fi) @ params["w3"].T + params["b3"]


if __name__ == "__main__":
    # Small shapes: batch=2, seq=8 (flattened to M=16 rows);
    # num_out_dims = (branch1_dim, branch2_dim, out_dim) = (32, 64, 32).
    batch, seq = 2, 8
    branch1_dim, branch2_dim, out_dim = 32, 64, 32
    M = batch * seq

    key = jax.random.PRNGKey(0)
    ks = jax.random.split(key, 13)

    x = jax.random.normal(ks[0], (batch, seq, out_dim), jnp.float32)
    inj_b1 = jax.random.normal(ks[1], (batch, seq, branch1_dim), jnp.float32)
    inj_b2 = jax.random.normal(ks[2], (batch, seq, branch2_dim), jnp.float32)
    res_b1 = jax.random.normal(ks[3], (batch, seq, out_dim), jnp.float32)
    res_b2 = jax.random.normal(ks[4], (batch, seq, out_dim), jnp.float32)

    def linear_init(kw, kb, fan_out, fan_in):
        bound = 1.0 / jnp.sqrt(fan_in)
        w = jax.random.uniform(kw, (fan_out, fan_in), jnp.float32, -bound, bound)
        b = jax.random.uniform(kb, (fan_out,), jnp.float32, -bound, bound)
        return w, b

    w1, b1 = linear_init(ks[5], ks[6], out_dim, branch1_dim)
    w2, b2 = linear_init(ks[7], ks[8], out_dim, branch2_dim)
    wi, bi = linear_init(ks[9], ks[10], out_dim, out_dim)
    w3, b3 = linear_init(ks[11], ks[12], out_dim, out_dim)
    params = dict(w1=w1, b1=b1, w2=w2, b2=b2, w_inj=wi, b_inj=bi, w3=w3, b3=b3)

    flat = lambda a: a.reshape(M, a.shape[-1])
    args = (flat(x), flat(inj_b1), flat(inj_b2), flat(res_b1), flat(res_b2), params)

    try:
        out = eqfusion_forward(*args)
        out = jax.block_until_ready(out)
    except Exception:
        # Single-buffered residents (pipeline_mode=pl.Buffered(1)) may be
        # unsupported on some jax/libtpu combos; fall back to default buffering.
        out = eqfusion_forward(*args, single_buffer_residents=False)
        out = jax.block_until_ready(out)

    out = out.astype(jnp.float32).reshape(batch, seq, out_dim)
    ref = reference_forward(*args).reshape(batch, seq, out_dim)

    # bf16 MXU operands (f32 accumulation) and a bf16 output vs an all-f32
    # reference -> bf16-level tolerance; values are O(1) so this still catches
    # formula bugs.
    err = jnp.max(jnp.abs(out - ref))
    assert jnp.allclose(out, ref, atol=5e-2, rtol=5e-2), f"mismatch vs reference, max abs err={err}"
    print("KERNEL_OK")
</pallas_src>

<mosaic_0001>
module attributes {stable_mosaic.version = 11 : i64} {
  func.func @eqfusion_kernel(%arg0: i32, %arg1: memref<8x128xf32, #tpu.memory_space<vmem>>, %arg2: memref<8x32xf32, #tpu.memory_space<vmem>>, %arg3: memref<8x64xf32, #tpu.memory_space<vmem>>, %arg4: memref<8x128xf32, #tpu.memory_space<vmem>>, %arg5: memref<8x128xf32, #tpu.memory_space<vmem>>, %arg6: memref<32x128xbf16, #tpu.memory_space<vmem>>, %arg7: memref<64x128xbf16, #tpu.memory_space<vmem>>, %arg8: memref<128x128xbf16, #tpu.memory_space<vmem>>, %arg9: memref<128x128xbf16, #tpu.memory_space<vmem>>, %arg10: memref<2x128xf32, #tpu.memory_space<vmem>>, %arg11: memref<8x128xbf16, #tpu.memory_space<vmem>>) attributes {dimension_semantics = [#tpu.dimension_semantics<parallel>], iteration_bounds = array<i64: 2>, scalar_prefetch = 0 : i64, scratch_operands = 0 : i64, tpu.core_type = #tpu.core_type<tc>, window_params = [{transform_indices = @transform_0, window_bounds = array<i64: 8, 128>}, {transform_indices = @transform_1, window_bounds = array<i64: 8, 32>}, {transform_indices = @transform_2, window_bounds = array<i64: 8, 64>}, {transform_indices = @transform_3, window_bounds = array<i64: 8, 128>}, {transform_indices = @transform_4, window_bounds = array<i64: 8, 128>}, {pipeline_mode = #tpu.pipeline_mode<synchronous>, transform_indices = @transform_5, window_bounds = array<i64: 32, 128>}, {pipeline_mode = #tpu.pipeline_mode<synchronous>, transform_indices = @transform_6, window_bounds = array<i64: 64, 128>}, {pipeline_mode = #tpu.pipeline_mode<synchronous>, transform_indices = @transform_7, window_bounds = array<i64: 128, 128>}, {pipeline_mode = #tpu.pipeline_mode<synchronous>, transform_indices = @transform_8, window_bounds = array<i64: 128, 128>}, {pipeline_mode = #tpu.pipeline_mode<synchronous>, transform_indices = @transform_9, window_bounds = array<i64: 2, 128>}, {transform_indices = @transform_10, window_bounds = array<i64: 8, 128>}]} {
    %c0 = arith.constant 0 : index
    %c0_0 = arith.constant 0 : index
    %0 = vector.load %arg2[%c0, %c0_0] : memref<8x32xf32, #tpu.memory_space<vmem>>, vector<8x32xf32>
    %1 = arith.truncf %0 : vector<8x32xf32> to vector<8x32xbf16>
    %c0_1 = arith.constant 0 : index
    %c0_2 = arith.constant 0 : index
    %2 = vector.load %arg6[%c0_1, %c0_2] : memref<32x128xbf16, #tpu.memory_space<vmem>>, vector<32x128xbf16>
    %cst = arith.constant dense<0.000000e+00> : vector<8x128xf32>
    %3 = tpu.matmul %1, %2, %cst {dimension_numbers = #tpu.dot_dimension_numbers<[1], [0], [0], [1], [0, 0, 1, 1], [], []>} : vector<8x32xbf16>, vector<32x128xbf16>, vector<8x128xf32> -> vector<8x128xf32>
    %c0_3 = arith.constant 0 : index
    %c0_4 = arith.constant 0 : index
    %4 = vector.load %arg3[%c0_3, %c0_4] : memref<8x64xf32, #tpu.memory_space<vmem>>, vector<8x64xf32>
    %5 = arith.truncf %4 : vector<8x64xf32> to vector<8x64xbf16>
    %c0_5 = arith.constant 0 : index
    %c0_6 = arith.constant 0 : index
    %6 = vector.load %arg7[%c0_5, %c0_6] : memref<64x128xbf16, #tpu.memory_space<vmem>>, vector<64x128xbf16>
    %cst_7 = arith.constant dense<0.000000e+00> : vector<8x128xf32>
    %7 = tpu.matmul %5, %6, %cst_7 {dimension_numbers = #tpu.dot_dimension_numbers<[1], [0], [0], [1], [0, 0, 1, 1], [], []>} : vector<8x64xbf16>, vector<64x128xbf16>, vector<8x128xf32> -> vector<8x128xf32>
    %8 = arith.addf %3, %7 : vector<8x128xf32>
    %c0_8 = arith.constant 0 : index
    %c0_9 = arith.constant 0 : index
    %9 = vector.load %arg10[%c0_8, %c0_9] : memref<2x128xf32, #tpu.memory_space<vmem>>, vector<1x128xf32>
    %10 = vector.broadcast %9 : vector<1x128xf32> to vector<8x128xf32>
    %11 = arith.addf %8, %10 : vector<8x128xf32>
    %c0_10 = arith.constant 0 : index
    %c0_11 = arith.constant 0 : index
    %12 = vector.load %arg4[%c0_10, %c0_11] : memref<8x128xf32, #tpu.memory_space<vmem>>, vector<8x128xf32>
    %c0_12 = arith.constant 0 : index
    %c0_13 = arith.constant 0 : index
    %13 = vector.load %arg5[%c0_12, %c0_13] : memref<8x128xf32, #tpu.memory_space<vmem>>, vector<8x128xf32>
    %14 = arith.addf %12, %13 : vector<8x128xf32>
    %15 = arith.truncf %14 : vector<8x128xf32> to vector<8x128xbf16>
    %c0_14 = arith.constant 0 : index
    %c0_15 = arith.constant 0 : index
    %16 = vector.load %arg8[%c0_14, %c0_15] : memref<128x128xbf16, #tpu.memory_space<vmem>>, vector<128x128xbf16>
    %cst_16 = arith.constant dense<0.000000e+00> : vector<8x128xf32>
    %17 = tpu.matmul %15, %16, %cst_16 {dimension_numbers = #tpu.dot_dimension_numbers<[1], [0], [0], [1], [0, 0, 1, 1], [], []>} : vector<8x128xbf16>, vector<128x128xbf16>, vector<8x128xf32> -> vector<8x128xf32>
    %c0_17 = arith.constant 0 : index
    %c0_18 = arith.constant 0 : index
    %18 = vector.load %arg1[%c0_17, %c0_18] : memref<8x128xf32, #tpu.memory_space<vmem>>, vector<8x128xf32>
    %19 = arith.mulf %18, %11 : vector<8x128xf32>
    %20 = arith.addf %19, %17 : vector<8x128xf32>
    %21 = arith.truncf %20 : vector<8x128xf32> to vector<8x128xbf16>
    %c0_19 = arith.constant 0 : index
    %c0_20 = arith.constant 0 : index
    %22 = vector.load %arg9[%c0_19, %c0_20] : memref<128x128xbf16, #tpu.memory_space<vmem>>, vector<128x128xbf16>
    %cst_21 = arith.constant dense<0.000000e+00> : vector<8x128xf32>
    %23 = tpu.matmul %21, %22, %cst_21 {dimension_numbers = #tpu.dot_dimension_numbers<[1], [0], [0], [1], [0, 0, 1, 1], [], []>} : vector<8x128xbf16>, vector<128x128xbf16>, vector<8x128xf32> -> vector<8x128xf32>
    %c1 = arith.constant 1 : index
    %c0_22 = arith.constant 0 : index
    %24 = vector.load %arg10[%c1, %c0_22] : memref<2x128xf32, #tpu.memory_space<vmem>>, vector<1x128xf32>
    %25 = vector.broadcast %24 : vector<1x128xf32> to vector<8x128xf32>
    %26 = arith.addf %23, %25 : vector<8x128xf32>
    %27 = arith.truncf %26 : vector<8x128xf32> to vector<8x128xbf16>
    %c0_23 = arith.constant 0 : index
    %c0_24 = arith.constant 0 : index
    %28 = vector.load %arg11[%c0_23, %c0_24] : memref<8x128xbf16, #tpu.memory_space<vmem>>, vector<8x128xbf16>
    tpu.vector_store %arg11[%c0_23, %c0_24], %27 {strides = array<i32>} : memref<8x128xbf16, #tpu.memory_space<vmem>>, vector<8x128xbf16>,
    return
  }
  func.func @transform_0(%arg0: i32) -> (i32, i32) {
    %c0_i32 = arith.constant 0 : i32
    %c0_i32_0 = arith.constant 0 : i32
    return %arg0, %c0_i32 : i32, i32
  }
  func.func @transform_1(%arg0: i32) -> (i32, i32) {
    %c0_i32 = arith.constant 0 : i32
    %c0_i32_0 = arith.constant 0 : i32
    return %arg0, %c0_i32 : i32, i32
  }
  func.func @transform_2(%arg0: i32) -> (i32, i32) {
    %c0_i32 = arith.constant 0 : i32
    %c0_i32_0 = arith.constant 0 : i32
    return %arg0, %c0_i32 : i32, i32
  }
  func.func @transform_3(%arg0: i32) -> (i32, i32) {
    %c0_i32 = arith.constant 0 : i32
    %c0_i32_0 = arith.constant 0 : i32
    return %arg0, %c0_i32 : i32, i32
  }
  func.func @transform_4(%arg0: i32) -> (i32, i32) {
    %c0_i32 = arith.constant 0 : i32
    %c0_i32_0 = arith.constant 0 : i32
    return %arg0, %c0_i32 : i32, i32
  }
  func.func @transform_5(%arg0: i32) -> (i32, i32) {
    %c0_i32 = arith.constant 0 : i32
    %c0_i32_0 = arith.constant 0 : i32
    %c0_i32_1 = arith.constant 0 : i32
    return %c0_i32, %c0_i32_0 : i32, i32
  }
  func.func @transform_6(%arg0: i32) -> (i32, i32) {
    %c0_i32 = arith.constant 0 : i32
    %c0_i32_0 = arith.constant 0 : i32
    %c0_i32_1 = arith.constant 0 : i32
    return %c0_i32, %c0_i32_0 : i32, i32
  }
  func.func @transform_7(%arg0: i32) -> (i32, i32) {
    %c0_i32 = arith.constant 0 : i32
    %c0_i32_0 = arith.constant 0 : i32
    %c0_i32_1 = arith.constant 0 : i32
    return %c0_i32, %c0_i32_0 : i32, i32
  }
  func.func @transform_8(%arg0: i32) -> (i32, i32) {
    %c0_i32 = arith.constant 0 : i32
    %c0_i32_0 = arith.constant 0 : i32
    %c0_i32_1 = arith.constant 0 : i32
    return %c0_i32, %c0_i32_0 : i32, i32
  }
  func.func @transform_9(%arg0: i32) -> (i32, i32) {
    %c0_i32 = arith.constant 0 : i32
    %c0_i32_0 = arith.constant 0 : i32
    %c0_i32_1 = arith.constant 0 : i32
    return %c0_i32, %c0_i32_0 : i32, i32
  }
  func.func @transform_10(%arg0: i32) -> (i32, i32) {
    %c0_i32 = arith.constant 0 : i32
    %c0_i32_0 = arith.constant 0 : i32
    return %arg0, %c0_i32 : i32, i32
  }
}

module attributes {stable_mosaic.version = 11 : i64} {
  func.func @eqfusion_kernel(%arg0: i32, %arg1: memref<8x128xf32, #tpu.memory_space<vmem>>, %arg2: memref<8x32xf32, #tpu.memory_space<vmem>>, %arg3: memref<8x64xf32, #tpu.memory_space<vmem>>, %arg4: memref<8x128xf32, #tpu.memory_space<vmem>>, %arg5: memref<8x128xf32, #tpu.memory_space<vmem>>, %arg6: memref<32x128xbf16, #tpu.memory_space<vmem>>, %arg7: memref<64x128xbf16, #tpu.memory_space<vmem>>, %arg8: memref<128x128xbf16, #tpu.memory_space<vmem>>, %arg9: memref<128x128xbf16, #tpu.memory_space<vmem>>, %arg10: memref<2x128xf32, #tpu.memory_space<vmem>>, %arg11: memref<8x128xbf16, #tpu.memory_space<vmem>>) attributes {dimension_semantics = [#tpu.dimension_semantics<parallel>], iteration_bounds = array<i64: 2>, scalar_prefetch = 0 : i64, scratch_operands = 0 : i64, tpu.core_type = #tpu.core_type<tc>, window_params = [{transform_indices = @transform_0, window_bounds = array<i64: 8, 128>}, {transform_indices = @transform_1, window_bounds = array<i64: 8, 32>}, {transform_indices = @transform_2, window_bounds = array<i64: 8, 64>}, {transform_indices = @transform_3, window_bounds = array<i64: 8, 128>}, {transform_indices = @transform_4, window_bounds = array<i64: 8, 128>}, {pipeline_mode = #tpu.pipeline_mode<synchronous>, transform_indices = @transform_5, window_bounds = array<i64: 32, 128>}, {pipeline_mode = #tpu.pipeline_mode<synchronous>, transform_indices = @transform_6, window_bounds = array<i64: 64, 128>}, {pipeline_mode = #tpu.pipeline_mode<synchronous>, transform_indices = @transform_7, window_bounds = array<i64: 128, 128>}, {pipeline_mode = #tpu.pipeline_mode<synchronous>, transform_indices = @transform_8, window_bounds = array<i64: 128, 128>}, {pipeline_mode = #tpu.pipeline_mode<synchronous>, transform_indices = @transform_9, window_bounds = array<i64: 2, 128>}, {transform_indices = @transform_10, window_bounds = array<i64: 8, 128>}]} {
    %c0 = arith.constant 0 : index
    %c0_0 = arith.constant 0 : index
    %0 = vector.load %arg2[%c0, %c0_0] : memref<8x32xf32, #tpu.memory_space<vmem>>, vector<8x32xf32>
    %1 = arith.truncf %0 : vector<8x32xf32> to vector<8x32xbf16>
    %c0_1 = arith.constant 0 : index
    %c0_2 = arith.constant 0 : index
    %2 = vector.load %arg6[%c0_1, %c0_2] : memref<32x128xbf16, #tpu.memory_space<vmem>>, vector<32x128xbf16>
    %cst = arith.constant dense<0.000000e+00> : vector<8x128xf32>
    %3 = tpu.matmul %1, %2, %cst {dimension_numbers = #tpu.dot_dimension_numbers<[1], [0], [0], [1], [0, 0, 1, 1], [], []>} : vector<8x32xbf16>, vector<32x128xbf16>, vector<8x128xf32> -> vector<8x128xf32>
    %c0_3 = arith.constant 0 : index
    %c0_4 = arith.constant 0 : index
    %4 = vector.load %arg3[%c0_3, %c0_4] : memref<8x64xf32, #tpu.memory_space<vmem>>, vector<8x64xf32>
    %5 = arith.truncf %4 : vector<8x64xf32> to vector<8x64xbf16>
    %c0_5 = arith.constant 0 : index
    %c0_6 = arith.constant 0 : index
    %6 = vector.load %arg7[%c0_5, %c0_6] : memref<64x128xbf16, #tpu.memory_space<vmem>>, vector<64x128xbf16>
    %cst_7 = arith.constant dense<0.000000e+00> : vector<8x128xf32>
    %7 = tpu.matmul %5, %6, %cst_7 {dimension_numbers = #tpu.dot_dimension_numbers<[1], [0], [0], [1], [0, 0, 1, 1], [], []>} : vector<8x64xbf16>, vector<64x128xbf16>, vector<8x128xf32> -> vector<8x128xf32>
    %8 = arith.addf %3, %7 : vector<8x128xf32>
    %c0_8 = arith.constant 0 : index
    %c0_9 = arith.constant 0 : index
    %9 = vector.load %arg10[%c0_8, %c0_9] : memref<2x128xf32, #tpu.memory_space<vmem>>, vector<1x128xf32>
    %10 = vector.broadcast %9 : vector<1x128xf32> to vector<8x128xf32>
    %11 = arith.addf %8, %10 : vector<8x128xf32>
    %c0_10 = arith.constant 0 : index
    %c0_11 = arith.constant 0 : index
    %12 = vector.load %arg4[%c0_10, %c0_11] : memref<8x128xf32, #tpu.memory_space<vmem>>, vector<8x128xf32>
    %c0_12 = arith.constant 0 : index
    %c0_13 = arith.constant 0 : index
    %13 = vector.load %arg5[%c0_12, %c0_13] : memref<8x128xf32, #tpu.memory_space<vmem>>, vector<8x128xf32>
    %14 = arith.addf %12, %13 : vector<8x128xf32>
    %15 = arith.truncf %14 : vector<8x128xf32> to vector<8x128xbf16>
    %c0_14 = arith.constant 0 : index
    %c0_15 = arith.constant 0 : index
    %16 = vector.load %arg8[%c0_14, %c0_15] : memref<128x128xbf16, #tpu.memory_space<vmem>>, vector<128x128xbf16>
    %cst_16 = arith.constant dense<0.000000e+00> : vector<8x128xf32>
    %17 = tpu.matmul %15, %16, %cst_16 {dimension_numbers = #tpu.dot_dimension_numbers<[1], [0], [0], [1], [0, 0, 1, 1], [], []>} : vector<8x128xbf16>, vector<128x128xbf16>, vector<8x128xf32> -> vector<8x128xf32>
    %c0_17 = arith.constant 0 : index
    %c0_18 = arith.constant 0 : index
    %18 = vector.load %arg1[%c0_17, %c0_18] : memref<8x128xf32, #tpu.memory_space<vmem>>, vector<8x128xf32>
    %19 = arith.mulf %18, %11 : vector<8x128xf32>
    %20 = arith.addf %19, %17 : vector<8x128xf32>
    %21 = arith.truncf %20 : vector<8x128xf32> to vector<8x128xbf16>
    %c0_19 = arith.constant 0 : index
    %c0_20 = arith.constant 0 : index
    %22 = vector.load %arg9[%c0_19, %c0_20] : memref<128x128xbf16, #tpu.memory_space<vmem>>, vector<128x128xbf16>
    %cst_21 = arith.constant dense<0.000000e+00> : vector<8x128xf32>
    %23 = tpu.matmul %21, %22, %cst_21 {dimension_numbers = #tpu.dot_dimension_numbers<[1], [0], [0], [1], [0, 0, 1, 1], [], []>} : vector<8x128xbf16>, vector<128x128xbf16>, vector<8x128xf32> -> vector<8x128xf32>
    %c1 = arith.constant 1 : index
    %c0_22 = arith.constant 0 : index
    %24 = vector.load %arg10[%c1, %c0_22] : memref<2x128xf32, #tpu.memory_space<vmem>>, vector<1x128xf32>
    %25 = vector.broadcast %24 : vector<1x128xf32> to vector<8x128xf32>
    %26 = arith.addf %23, %25 : vector<8x128xf32>
    %27 = arith.truncf %26 : vector<8x128xf32> to vector<8x128xbf16>
    %c0_23 = arith.constant 0 : index
    %c0_24 = arith.constant 0 : index
    %28 = vector.load %arg11[%c0_23, %c0_24] : memref<8x128xbf16, #tpu.memory_space<vmem>>, vector<8x128xbf16>
    tpu.vector_store %arg11[%c0_23, %c0_24], %27 {strides = array<i32>} : memref<8x128xbf16, #tpu.memory_space<vmem>>, vector<8x128xbf16>,
    return
  }
  func.func @transform_0(%arg0: i32) -> (i32, i32) {
    %c0_i32 = arith.constant 0 : i32
    %c0_i32_0 = arith.constant 0 : i32
    return %arg0, %c0_i32 : i32, i32
  }
  func.func @transform_1(%arg0: i32) -> (i32, i32) {
    %c0_i32 = arith.constant 0 : i32
    %c0_i32_0 = arith.constant 0 : i32
    return %arg0, %c0_i32 : i32, i32
  }
  func.func @transform_2(%arg0: i32) -> (i32, i32) {
    %c0_i32 = arith.constant 0 : i32
    %c0_i32_0 = arith.constant 0 : i32
    return %arg0, %c0_i32 : i32, i32
  }
  func.func @transform_3(%arg0: i32) -> (i32, i32) {
    %c0_i32 = arith.constant 0 : i32
    %c0_i32_0 = arith.constant 0 : i32
    return %arg0, %c0_i32 : i32, i32
  }
  func.func @transform_4(%arg0: i32) -> (i32, i32) {
    %c0_i32 = arith.constant 0 : i32
    %c0_i32_0 = arith.constant 0 : i32
    return %arg0, %c0_i32 : i32, i32
  }
  func.func @transform_5(%arg0: i32) -> (i32, i32) {
    %c0_i32 = arith.constant 0 : i32
    %c0_i32_0 = arith.constant 0 : i32
    %c0_i32_1 = arith.constant 0 : i32
    return %c0_i32, %c0_i32_0 : i32, i32
  }
  func.func @transform_6(%arg0: i32) -> (i32, i32) {
    %c0_i32 = arith.constant 0 : i32
    %c0_i32_0 = arith.constant 0 : i32
    %c0_i32_1 = arith.constant 0 : i32
    return %c0_i32, %c0_i32_0 : i32, i32
  }
  func.func @transform_7(%arg0: i32) -> (i32, i32) {
    %c0_i32 = arith.constant 0 : i32
    %c0_i32_0 = arith.constant 0 : i32
    %c0_i32_1 = arith.constant 0 : i32
    return %c0_i32, %c0_i32_0 : i32, i32
  }
  func.func @transform_8(%arg0: i32) -> (i32, i32) {
    %c0_i32 = arith.constant 0 : i32
    %c0_i32_0 = arith.constant 0 : i32
    %c0_i32_1 = arith.constant 0 : i32
    return %c0_i32, %c0_i32_0 : i32, i32
  }
  func.func @transform_9(%arg0: i32) -> (i32, i32) {
    %c0_i32 = arith.constant 0 : i32
    %c0_i32_0 = arith.constant 0 : i32
    %c0_i32_1 = arith.constant 0 : i32
    return %c0_i32, %c0_i32_0 : i32, i32
  }
  func.func @transform_10(%arg0: i32) -> (i32, i32) {
    %c0_i32 = arith.constant 0 : i32
    %c0_i32_0 = arith.constant 0 : i32
    return %arg0, %c0_i32 : i32, i32
  }
}

</mosaic_0001>

<llo_original>
// kernel: tpu_custom_call.1
$region0: #{tpu_custom_call.1}
  #allocation0 [shape = 'u32[]', space=smem, size = 0x4, offset = 0x4, fixed_abs, tag = 'smem constant byte address 0x4 - core index']
  #allocation1 [shape = 'u32[144,128]{1,0:T(1,128)}', space=vmem, size = 0x12000, scoped, tag = 'internal scratch']
  %s0 = inlined_call_operand.hbm [shape: f32[16,128], index: 0, kind: input, shape index: {}]
  %s1 = inlined_call_operand.hbm [shape: f32[16,32], index: 1, kind: input, shape index: {}]
  %s2 = inlined_call_operand.hbm [shape: f32[16,64], index: 2, kind: input, shape index: {}]
  %s3 = inlined_call_operand.hbm [shape: f32[16,128], index: 3, kind: input, shape index: {}]
  %s4 = inlined_call_operand.hbm [shape: f32[16,128], index: 4, kind: input, shape index: {}]
  %s5 = inlined_call_operand.vmem [shape: bf16[32,128], index: 5, kind: input, shape index: {}]
  %s6 = inlined_call_operand.hbm [shape: bf16[64,128], index: 6, kind: input, shape index: {}]
  %s7 = inlined_call_operand.hbm [shape: bf16[128,128], index: 7, kind: input, shape index: {}]
  %s8 = inlined_call_operand.hbm [shape: bf16[128,128], index: 8, kind: input, shape index: {}]
  %s9 = inlined_call_operand.vmem [shape: f32[2,128], index: 9, kind: input, shape index: {}]
  %s10 = inlined_call_operand.hbm [shape: bf16[16,128], index: 10, kind: output, shape index: {}]
  %s11 = sld [smem:[#allocation0]]
  $region105: #{tpu_custom_call.1} parent=0
    _
  %s13 = ssub.s32 1, %s11
  %s14 = scalar_select 0, %s13, %s11
  $region1: #{tpu_custom_call.1} parent=0
    #allocation2 [shape = 'u8[8192]{0}', space=vmem, size = 0x2000, scoped, tag = 'input window, operand 0']
    #allocation3 [shape = 's32[2]{0}', space=sflag, size = 0x8, scoped, tag = 'scoped memory for tpu_custom_call.1']
    #allocation4 [shape = 's32[2]{0}', space=sflag, size = 0x8, scoped, tag = 'scoped memory for tpu_custom_call.1']
    #allocation5 [shape = 'u8[8192]{0}', space=vmem, size = 0x2000, scoped, tag = 'input window, operand 1']
    #allocation6 [shape = 's32[2]{0}', space=sflag, size = 0x8, scoped, tag = 'scoped memory for tpu_custom_call.1']
    #allocation7 [shape = 'u8[8192]{0}', space=vmem, size = 0x2000, scoped, tag = 'input window, operand 2']
    #allocation8 [shape = 'u8[8192]{0}', space=vmem, size = 0x2000, scoped, tag = 'input window, operand 3']
    #allocation9 [shape = 's32[2]{0}', space=sflag, size = 0x8, scoped, tag = 'scoped memory for tpu_custom_call.1']
    #allocation10 [shape = 'u8[8192]{0}', space=vmem, size = 0x2000, scoped, tag = 'input window, operand 4']
    #allocation11 [shape = 'u8[16384]{0}', space=vmem, size = 0x4000, scoped, tag = 'input window, operand 6, single buffered']
    #allocation12 [shape = 's32[1]{0}', space=sflag, size = 0x4, scoped, tag = 'scoped memory for tpu_custom_call.1']
    #allocation13 [shape = 'u8[32768]{0}', space=vmem, size = 0x8000, scoped, tag = 'input window, operand 7, single buffered']
    #allocation14 [shape = 'u8[32768]{0}', space=vmem, size = 0x8000, scoped, tag = 'input window, operand 8, single buffered']
    #allocation15 [shape = 's32[1]{0}', space=sflag, size = 0x4, scoped, tag = 'scoped memory for tpu_custom_call.1']
    #allocation16 [shape = 'u8[4096]{0}', space=vmem, size = 0x1000, scoped, tag = 'output window, operand 0']
    %15 = vsyncpa [#allocation3], 0
    %s16 = scalar_lea.sflag [#allocation3], 1
    %17 = vsyncpa %s16, 0
    %18 = vsyncpa [#allocation6], 0
    %s19 = scalar_lea.sflag [#allocation6], 1
    %20 = vsyncpa %s19, 0
    %21 = vsyncpa [#allocation9], 0
    %s22 = scalar_lea.sflag [#allocation9], 1
    %23 = vsyncpa %s22, 0
    %24 = vsyncpa [#allocation12], 0
    %25 = vsyncpa [#allocation15], 0
    %26 = vsyncpa [#allocation4], 0
    %s27 = scalar_lea.sflag [#allocation4], 1
    %28 = vsyncpa %s27, 0
    loop: start=0, step=1, limit=4
    $region2: #{tpu_custom_call.1} parent=1 // loop_pre_header
      _
    $region3: #{tpu_custom_call.1} parent=1 // loop_header
      %s30 = sphi 0, %s34
      %p31 = scmp.ge.s32.totalorder %s30, 4
      %s40 = sphi 0, %s42
      %s43 = sphi 0, %s40
      %s44 = sphi 0, %s43
      %s60 = sphi 0, %s44
      %s66 = sphi 0, %s68
      %s69 = sphi 0, %s66
      %s70 = sphi 0, %s69
      %s86 = sphi 0, %s70
      %s92 = sphi 0, %s94
      %s95 = sphi 0, %s92
      %s96 = sphi 0, %s95
      %s112 = sphi 0, %s96
      %s118 = sphi 0, %s120
      %s121 = sphi 0, %s118
      %s122 = sphi 0, %s121
      %s138 = sphi 0, %s122
      %s144 = sphi 0, %s146
      %s147 = sphi 0, %s144
      %s148 = sphi 0, %s147
      %s164 = sphi 0, %s148
      %s168 = sphi 0, %s168
      %s170 = sphi 0, %s168
      %s171 = sphi 0, %s170
      %s185 = sphi 0, %s171
      %s189 = sphi 0, %s189
      %s191 = sphi 0, %s189
      %s192 = sphi 0, %s191
      %s206 = sphi 0, %s192
      %s210 = sphi 0, %s210
      %s212 = sphi 0, %s210
      %s213 = sphi 0, %s212
      %s227 = sphi 0, %s213
      %s231 = sphi 0, %s231
      %s233 = sphi 0, %s231
      %s234 = sphi 0, %s233
      %s248 = sphi 0, %s234
      %s252 = sphi 0, %s252
      %s254 = sphi 0, %s252
      %s255 = sphi 0, %s254
      %s269 = sphi 0, %s255
      %s275 = sphi 0, %s277
      %s278 = sphi 0, %s275
      %s279 = sphi 0, %s278
      %s295 = sphi 0, %s279
    $region4: #{tpu_custom_call.1} parent=1 // loop_header_branch
      %33 = sbr.rel (%p31) target = $region8
    $region5: #{tpu_custom_call.1} parent=1 // loop_body
      %s35 = ssub.s32 %s30, 1
      %s36 = ssub.s32 %s30, 2
      %s37 = sadd.s32 %s30, 1
      %s38 = ssub.s32 %s30, %s37
      %p39 = scmp.eq.s32.totalorder %s38, 0
      %s41 = sadd.s32 %s40, 1
      %s42 = scalar_select %p39, %s40, %s41
      %p45 = pneg %p39
      %p46 = scmp.eq.s32.totalorder %s30, 1
      %p47 = por %p45, %p46
      %p48 = scmp.ne.s32.totalorder %s40, %s43
      %p49 = scmp.eq.s32.totalorder %s30, 0
      %p50 = por %p48, %p49
      %p51 = scmp.ne.s32.totalorder %s40, %s43
      %p52 = scmp.eq.s32.totalorder %s35, 1
      %p53 = por %p51, %p52
      %p54 = scmp.ne.s32.totalorder %s43, %s44
      %p55 = scmp.eq.s32.totalorder %s35, 0
      %p56 = por %p54, %p55
      %p57 = scmp.ne.s32.totalorder %s43, %s44
      %p58 = scmp.eq.s32.totalorder %s36, 1
      %p59 = por %p57, %p58
      %p61 = scmp.ne.s32.totalorder %s44, %s60
      %p62 = scmp.eq.s32.totalorder %s36, 0
      %p63 = por %p61, %p62
      %s64 = ssub.s32 %s30, %s37
      %p65 = scmp.eq.s32.totalorder %s64, 0
      %s67 = sadd.s32 %s66, 1
      %s68 = scalar_select %p65, %s66, %s67
      %p71 = pneg %p65
      %p72 = scmp.eq.s32.totalorder %s30, 1
      %p73 = por %p71, %p72
      %p74 = scmp.ne.s32.totalorder %s66, %s69
      %p75 = scmp.eq.s32.totalorder %s30, 0
      %p76 = por %p74, %p75
      %p77 = scmp.ne.s32.totalorder %s66, %s69
      %p78 = scmp.eq.s32.totalorder %s35, 1
      %p79 = por %p77, %p78
      %p80 = scmp.ne.s32.totalorder %s69, %s70
      %p81 = scmp.eq.s32.totalorder %s35, 0
      %p82 = por %p80, %p81
      %p83 = scmp.ne.s32.totalorder %s69, %s70
      %p84 = scmp.eq.s32.totalorder %s36, 1
      %p85 = por %p83, %p84
      %p87 = scmp.ne.s32.totalorder %s70, %s86
      %p88 = scmp.eq.s32.totalorder %s36, 0
      %p89 = por %p87, %p88
      %s90 = ssub.s32 %s30, %s37
      %p91 = scmp.eq.s32.totalorder %s90, 0
      %s93 = sadd.s32 %s92, 1
      %s94 = scalar_select %p91, %s92, %s93
      %p97 = pneg %p91
      %p98 = scmp.eq.s32.totalorder %s30, 1
      %p99 = por %p97, %p98
      %p100 = scmp.ne.s32.totalorder %s92, %s95
      %p101 = scmp.eq.s32.totalorder %s30, 0
      %p102 = por %p100, %p101
      %p103 = scmp.ne.s32.totalorder %s92, %s95
      %p104 = scmp.eq.s32.totalorder %s35, 1
      %p105 = por %p103, %p104
      %p106 = scmp.ne.s32.totalorder %s95, %s96
      %p107 = scmp.eq.s32.totalorder %s35, 0
      %p108 = por %p106, %p107
      %p109 = scmp.ne.s32.totalorder %s95, %s96
      %p110 = scmp.eq.s32.totalorder %s36, 1
      %p111 = por %p109, %p110
      %p113 = scmp.ne.s32.totalorder %s96, %s112
      %p114 = scmp.eq.s32.totalorder %s36, 0
      %p115 = por %p113, %p114
      %s116 = ssub.s32 %s30, %s37
      %p117 = scmp.eq.s32.totalorder %s116, 0
      %s119 = sadd.s32 %s118, 1
      %s120 = scalar_select %p117, %s118, %s119
      %p123 = pneg %p117
      %p124 = scmp.eq.s32.totalorder %s30, 1
      %p125 = por %p123, %p124
      %p126 = scmp.ne.s32.totalorder %s118, %s121
      %p127 = scmp.eq.s32.totalorder %s30, 0
      %p128 = por %p126, %p127
      %p129 = scmp.ne.s32.totalorder %s118, %s121
      %p130 = scmp.eq.s32.totalorder %s35, 1
      %p131 = por %p129, %p130
      %p132 = scmp.ne.s32.totalorder %s121, %s122
      %p133 = scmp.eq.s32.totalorder %s35, 0
      %p134 = por %p132, %p133
      %p135 = scmp.ne.s32.totalorder %s121, %s122
      %p136 = scmp.eq.s32.totalorder %s36, 1
      %p137 = por %p135, %p136
      %p139 = scmp.ne.s32.totalorder %s122, %s138
      %p140 = scmp.eq.s32.totalorder %s36, 0
      %p141 = por %p139, %p140
      %s142 = ssub.s32 %s30, %s37
      %p143 = scmp.eq.s32.totalorder %s142, 0
      %s145 = sadd.s32 %s144, 1
      %s146 = scalar_select %p143, %s144, %s145
      %p149 = pneg %p143
      %p150 = scmp.eq.s32.totalorder %s30, 1
      %p151 = por %p149, %p150
      %p152 = scmp.ne.s32.totalorder %s144, %s147
      %p153 = scmp.eq.s32.totalorder %s30, 0
      %p154 = por %p152, %p153
      %p155 = scmp.ne.s32.totalorder %s144, %s147
      %p156 = scmp.eq.s32.totalorder %s35, 1
      %p157 = por %p155, %p156
      %p158 = scmp.ne.s32.totalorder %s147, %s148
      %p159 = scmp.eq.s32.totalorder %s35, 0
      %p160 = por %p158, %p159
      %p161 = scmp.ne.s32.totalorder %s147, %s148
      %p162 = scmp.eq.s32.totalorder %s36, 1
      %p163 = por %p161, %p162
      %p165 = scmp.ne.s32.totalorder %s148, %s164
      %p166 = scmp.eq.s32.totalorder %s36, 0
      %p167 = por %p165, %p166
      %s169 = sadd.s32 %s168, 1
      %p172 = scmp.eq.s32.totalorder %s30, 1
      %p173 = scmp.ne.s32.totalorder %s168, %s170
      %p174 = scmp.eq.s32.totalorder %s30, 0
      %p175 = por %p173, %p174
      %p176 = scmp.ne.s32.totalorder %s168, %s170
      %p177 = scmp.eq.s32.totalorder %s35, 1
      %p178 = por %p176, %p177
      %p179 = scmp.ne.s32.totalorder %s170, %s171
      %p180 = scmp.eq.s32.totalorder %s35, 0
      %p181 = por %p179, %p180
      %p182 = scmp.ne.s32.totalorder %s170, %s171
      %p183 = scmp.eq.s32.totalorder %s36, 1
      %p184 = por %p182, %p183
      %p186 = scmp.ne.s32.totalorder %s171, %s185
      %p187 = scmp.eq.s32.totalorder %s36, 0
      %p188 = por %p186, %p187
      %s190 = sadd.s32 %s189, 1
      %p193 = scmp.eq.s32.totalorder %s30, 1
      %p194 = scmp.ne.s32.totalorder %s189, %s191
      %p195 = scmp.eq.s32.totalorder %s30, 0
      %p196 = por %p194, %p195
      %p197 = scmp.ne.s32.totalorder %s189, %s191
      %p198 = scmp.eq.s32.totalorder %s35, 1
      %p199 = por %p197, %p198
      %p200 = scmp.ne.s32.totalorder %s191, %s192
      %p201 = scmp.eq.s32.totalorder %s35, 0
      %p202 = por %p200, %p201
      %p203 = scmp.ne.s32.totalorder %s191, %s192
      %p204 = scmp.eq.s32.totalorder %s36, 1
      %p205 = por %p203, %p204
      %p207 = scmp.ne.s32.totalorder %s192, %s206
      %p208 = scmp.eq.s32.totalorder %s36, 0
      %p209 = por %p207, %p208
      %s211 = sadd.s32 %s210, 1
      %p214 = scmp.eq.s32.totalorder %s30, 1
      %p215 = scmp.ne.s32.totalorder %s210, %s212
      %p216 = scmp.eq.s32.totalorder %s30, 0
      %p217 = por %p215, %p216
      %p218 = scmp.ne.s32.totalorder %s210, %s212
      %p219 = scmp.eq.s32.totalorder %s35, 1
      %p220 = por %p218, %p219
      %p221 = scmp.ne.s32.totalorder %s212, %s213
      %p222 = scmp.eq.s32.totalorder %s35, 0
      %p223 = por %p221, %p222
      %p224 = scmp.ne.s32.totalorder %s212, %s213
      %p225 = scmp.eq.s32.totalorder %s36, 1
      %p226 = por %p224, %p225
      %p228 = scmp.ne.s32.totalorder %s213, %s227
      %p229 = scmp.eq.s32.totalorder %s36, 0
      %p230 = por %p228, %p229
      %s232 = sadd.s32 %s231, 1
      %p235 = scmp.eq.s32.totalorder %s30, 1
      %p236 = scmp.ne.s32.totalorder %s231, %s233
      %p237 = scmp.eq.s32.totalorder %s30, 0
      %p238 = por %p236, %p237
      %p239 = scmp.ne.s32.totalorder %s231, %s233
      %p240 = scmp.eq.s32.totalorder %s35, 1
      %p241 = por %p239, %p240
      %p242 = scmp.ne.s32.totalorder %s233, %s234
      %p243 = scmp.eq.s32.totalorder %s35, 0
      %p244 = por %p242, %p243
      %p245 = scmp.ne.s32.totalorder %s233, %s234
      %p246 = scmp.eq.s32.totalorder %s36, 1
      %p247 = por %p245, %p246
      %p249 = scmp.ne.s32.totalorder %s234, %s248
      %p250 = scmp.eq.s32.totalorder %s36, 0
      %p251 = por %p249, %p250
      %s253 = sadd.s32 %s252, 1
      %p256 = scmp.eq.s32.totalorder %s30, 1
      %p257 = scmp.ne.s32.totalorder %s252, %s254
      %p258 = scmp.eq.s32.totalorder %s30, 0
      %p259 = por %p257, %p258
      %p260 = scmp.ne.s32.totalorder %s252, %s254
      %p261 = scmp.eq.s32.totalorder %s35, 1
      %p262 = por %p260, %p261
      %p263 = scmp.ne.s32.totalorder %s254, %s255
      %p264 = scmp.eq.s32.totalorder %s35, 0
      %p265 = por %p263, %p264
      %p266 = scmp.ne.s32.totalorder %s254, %s255
      %p267 = scmp.eq.s32.totalorder %s36, 1
      %p268 = por %p266, %p267
      %p270 = scmp.ne.s32.totalorder %s255, %s269
      %p271 = scmp.eq.s32.totalorder %s36, 0
      %p272 = por %p270, %p271
      %s273 = ssub.s32 %s30, %s37
      %p274 = scmp.eq.s32.totalorder %s273, 0
      %s276 = sadd.s32 %s275, 1
      %s277 = scalar_select %p274, %s275, %s276
      %p280 = pneg %p274
      %p281 = scmp.eq.s32.totalorder %s30, 1
      %p282 = por %p280, %p281
      %p283 = scmp.ne.s32.totalorder %s275, %s278
      %p284 = scmp.eq.s32.totalorder %s30, 0
      %p285 = por %p283, %p284
      %p286 = scmp.ne.s32.totalorder %s275, %s278
      %p287 = scmp.eq.s32.totalorder %s35, 1
      %p288 = por %p286, %p287
      %p289 = scmp.ne.s32.totalorder %s278, %s279
      %p290 = scmp.eq.s32.totalorder %s35, 0
      %p291 = por %p289, %p290
      %p292 = scmp.ne.s32.totalorder %s278, %s279
      %p293 = scmp.eq.s32.totalorder %s36, 1
      %p294 = por %p292, %p293
      %p296 = scmp.ne.s32.totalorder %s279, %s295
      %p297 = scmp.eq.s32.totalorder %s36, 0
      %p298 = por %p296, %p297
      %p299 = scmp.le.s32.totalorder 1, %s30
      %p300 = scmp.lt.s32.totalorder %s30, 3
      %p301 = pnand %p299, %p300
      %p302 = pneg %p301
      // Predicated region
      $region9: #{tpu_custom_call.1} parent=5 // pred_check
        _
      $region10: #{tpu_custom_call.1} parent=5 // pred_check_branch
        %304 = sbr.rel (%p301) target = $region12
      $region11: #{tpu_custom_call.1} parent=5 // pred_region
        %s305 = ssub.s32 %s30, 1
        // Predicated region
        $region13: #{tpu_custom_call.1} parent=11 // pred_check
          %p306 = pneg %p181
        $region14: #{tpu_custom_call.1} parent=11 // pred_check_branch
          %308 = sbr.rel (%p306) target = $region16
        $region15: #{tpu_custom_call.1} parent=11 // pred_region
          _
        $region16: #{tpu_custom_call.1} parent=11 // pred_fallthru
          _
        // Predicated region
        $region17: #{tpu_custom_call.1} parent=11 // pred_check
          %p309 = pneg %p202
        $region18: #{tpu_custom_call.1} parent=11 // pred_check_branch
          %311 = sbr.rel (%p309) target = $region20
        $region19: #{tpu_custom_call.1} parent=11 // pred_region
          %s313 = ssub.s32 512, 512
          %314 = vsyncadd [#allocation12], %s313
          %s315 = sshll.u32 [#allocation11], 4
          %s316 = int_to_ptr.vmem [resolvable:$true] %s315
          %321 = dma.hbm_to_vmem [thread:$0]  %s6, 512, %s316, [#allocation12], 64, 64, 4
        $region20: #{tpu_custom_call.1} parent=11 // pred_fallthru
          _
        // Predicated region
        $region21: #{tpu_custom_call.1} parent=11 // pred_check
          %p322 = pneg %p223
        $region22: #{tpu_custom_call.1} parent=11 // pred_check_branch
          %324 = sbr.rel (%p322) target = $region24
        $region23: #{tpu_custom_call.1} parent=11 // pred_region
          %s326 = ssub.s32 1024, 1024
          %327 = vsyncadd [#allocation12], %s326
          %s328 = sshll.u32 [#allocation13], 4
          %s329 = int_to_ptr.vmem [resolvable:$true] %s328
          %334 = dma.hbm_to_vmem [thread:$0]  %s7, 1024, %s329, [#allocation12], 64, 64, 4
        $region24: #{tpu_custom_call.1} parent=11 // pred_fallthru
          _
        // Predicated region
        $region25: #{tpu_custom_call.1} parent=11 // pred_check
          %p335 = pneg %p244
        $region26: #{tpu_custom_call.1} parent=11 // pred_check_branch
          %337 = sbr.rel (%p335) target = $region28
        $region27: #{tpu_custom_call.1} parent=11 // pred_region
          %s339 = ssub.s32 1024, 1024
          %340 = vsyncadd [#allocation15], %s339
          %s341 = sshll.u32 [#allocation14], 4
          %s342 = int_to_ptr.vmem [resolvable:$true] %s341
          %347 = dma.hbm_to_vmem [thread:$0]  %s8, 1024, %s342, [#allocation15], 64, 64, 4
        $region28: #{tpu_custom_call.1} parent=11 // pred_fallthru
          _
        // Predicated region
        $region29: #{tpu_custom_call.1} parent=11 // pred_check
          %p348 = pneg %p265
        $region30: #{tpu_custom_call.1} parent=11 // pred_check_branch
          %350 = sbr.rel (%p348) target = $region32
        $region31: #{tpu_custom_call.1} parent=11 // pred_region
          _
        $region32: #{tpu_custom_call.1} parent=11 // pred_fallthru
          _
      $region12: #{tpu_custom_call.1} parent=5 // pred_fallthru
        _
      %p351 = scmp.lt.s32.totalorder %s30, 2
      // Predicated region
      $region33: #{tpu_custom_call.1} parent=5 // pred_check
        %p352 = pneg %p351
      $region34: #{tpu_custom_call.1} parent=5 // pred_check_branch
        %354 = sbr.rel (%p352) target = $region36
      $region35: #{tpu_custom_call.1} parent=5 // pred_region
        // Predicated region
        $region37: #{tpu_custom_call.1} parent=35 // pred_check
          %p355 = pneg %p50
        $region38: #{tpu_custom_call.1} parent=35 // pred_check_branch
          %357 = sbr.rel (%p355) target = $region40
        $region39: #{tpu_custom_call.1} parent=35 // pred_region
          %s358 = sand.u32 %s40, 1
          %s359 = scalar_lea.sflag [#allocation3], %s358
          %s360 = sand.u32 %s40, 1
          %s361 = smul.addr %s360, 8
          %s362 = scalar_lea.vmem [#allocation2], %s361
          %s364 = ssub.s32 128, 128
          %365 = vsyncadd %s359, %s364
          %s366 = smul.addr %s30, 128
          %s367 = scalar_lea.hbm %s0, %s366
          %s369 = sshll.u32 %s362, 4
          %s370 = int_to_ptr.vmem [resolvable:$true] %s369
          %372 = dma.hbm_to_vmem [thread:$0]  %s367, 128, %s370, %s359
        $region40: #{tpu_custom_call.1} parent=35 // pred_fallthru
          _
        // Predicated region
        $region41: #{tpu_custom_call.1} parent=35 // pred_check
          %p373 = pneg %p76
        $region42: #{tpu_custom_call.1} parent=35 // pred_check_branch
          %375 = sbr.rel (%p373) target = $region44
        $region43: #{tpu_custom_call.1} parent=35 // pred_region
          %s376 = sand.u32 %s30, 1
          %s377 = scalar_lea.sflag [#allocation6], %s376
          %s378 = sand.u32 %s66, 1
          %s379 = smul.addr %s378, 8
          %s380 = scalar_lea.vmem [#allocation5], %s379
          %s382 = ssub.s32 128, 128
          %383 = vsyncadd %s377, %s382
          %s384 = smul.addr %s30, 128
          %s385 = scalar_lea.hbm %s1, %s384
          %s387 = sshll.u32 %s380, 4
          %s388 = int_to_ptr.vmem [resolvable:$true] %s387
          %390 = dma.hbm_to_vmem [thread:$0]  %s385, 128, %s388, %s377
        $region44: #{tpu_custom_call.1} parent=35 // pred_fallthru
          _
        // Predicated region
        $region45: #{tpu_custom_call.1} parent=35 // pred_check
          %p391 = pneg %p102
        $region46: #{tpu_custom_call.1} parent=35 // pred_check_branch
          %393 = sbr.rel (%p391) target = $region48
        $region47: #{tpu_custom_call.1} parent=35 // pred_region
          %s394 = sand.u32 %s30, 1
          %s395 = scalar_lea.sflag [#allocation6], %s394
          %s396 = sand.u32 %s92, 1
          %s397 = smul.addr %s396, 8
          %s398 = scalar_lea.vmem [#allocation7], %s397
          %s400 = ssub.s32 128, 128
          %401 = vsyncadd %s395, %s400
          %s402 = smul.addr %s30, 128
          %s403 = scalar_lea.hbm %s2, %s402
          %s405 = sshll.u32 %s398, 4
          %s406 = int_to_ptr.vmem [resolvable:$true] %s405
          %408 = dma.hbm_to_vmem [thread:$0]  %s403, 128, %s406, %s395
        $region48: #{tpu_custom_call.1} parent=35 // pred_fallthru
          _
        // Predicated region
        $region49: #{tpu_custom_call.1} parent=35 // pred_check
          %p409 = pneg %p128
        $region50: #{tpu_custom_call.1} parent=35 // pred_check_branch
          %411 = sbr.rel (%p409) target = $region52
        $region51: #{tpu_custom_call.1} parent=35 // pred_region
          %s412 = sand.u32 %s30, 1
          %s413 = scalar_lea.sflag [#allocation9], %s412
          %s414 = sand.u32 %s118, 1
          %s415 = smul.addr %s414, 8
          %s416 = scalar_lea.vmem [#allocation8], %s415
          %s418 = ssub.s32 128, 128
          %419 = vsyncadd %s413, %s418
          %s420 = smul.addr %s30, 128
          %s421 = scalar_lea.hbm %s3, %s420
          %s423 = sshll.u32 %s416, 4
          %s424 = int_to_ptr.vmem [resolvable:$true] %s423
          %426 = dma.hbm_to_vmem [thread:$0]  %s421, 128, %s424, %s413
        $region52: #{tpu_custom_call.1} parent=35 // pred_fallthru
          _
        // Predicated region
        $region53: #{tpu_custom_call.1} parent=35 // pred_check
          %p427 = pneg %p154
        $region54: #{tpu_custom_call.1} parent=35 // pred_check_branch
          %429 = sbr.rel (%p427) target = $region56
        $region55: #{tpu_custom_call.1} parent=35 // pred_region
          %s430 = sand.u32 %s30, 1
          %s431 = scalar_lea.sflag [#allocation9], %s430
          %s432 = sand.u32 %s144, 1
          %s433 = smul.addr %s432, 8
          %s434 = scalar_lea.vmem [#allocation10], %s433
          %s436 = ssub.s32 128, 128
          %437 = vsyncadd %s431, %s436
          %s438 = smul.addr %s30, 128
          %s439 = scalar_lea.hbm %s4, %s438
          %s441 = sshll.u32 %s434, 4
          %s442 = int_to_ptr.vmem [resolvable:$true] %s441
          %444 = dma.hbm_to_vmem [thread:$0]  %s439, 128, %s442, %s431
        $region56: #{tpu_custom_call.1} parent=35 // pred_fallthru
          _
      $region36: #{tpu_custom_call.1} parent=5 // pred_fallthru
        _
      %p445 = scmp.le.s32.totalorder 1, %s30
      %p446 = scmp.lt.s32.totalorder %s30, 3
      %p447 = pnand %p445, %p446
      %p448 = pneg %p447
      // Predicated region
      $region57: #{tpu_custom_call.1} parent=5 // pred_check
        _
      $region58: #{tpu_custom_call.1} parent=5 // pred_check_branch
        %450 = sbr.rel (%p447) target = $region60
      $region59: #{tpu_custom_call.1} parent=5 // pred_region
        %s451 = ssub.s32 %s30, 1
        %s452 = sand.u32 %s43, 1
        %s453 = scalar_lea.sflag [#allocation3], %s452
        %s454 = sand.u32 %s43, 1
        %s455 = smul.addr %s454, 8
        %s456 = scalar_lea.vmem [#allocation2], %s455
        // Predicated region
        $region61: #{tpu_custom_call.1} parent=59 // pred_check
          %p457 = pneg %p56
        $region62: #{tpu_custom_call.1} parent=59 // pred_check_branch
          %459 = sbr.rel (%p457) target = $region64
        $region63: #{tpu_custom_call.1} parent=59 // pred_region
          %460 = dma.done %s453, 128
        $region64: #{tpu_custom_call.1} parent=59 // pred_fallthru
          _
        %s461 = sand.u32 %s35, 1
        %s462 = scalar_lea.sflag [#allocation6], %s461
        %s463 = sand.u32 %s69, 1
        %s464 = smul.addr %s463, 8
        %s465 = scalar_lea.vmem [#allocation5], %s464
        // Predicated region
        $region65: #{tpu_custom_call.1} parent=59 // pred_check
          %p466 = pneg %p82
        $region66: #{tpu_custom_call.1} parent=59 // pred_check_branch
          %468 = sbr.rel (%p466) target = $region68
        $region67: #{tpu_custom_call.1} parent=59 // pred_region
          %469 = dma.done %s462, 128
        $region68: #{tpu_custom_call.1} parent=59 // pred_fallthru
          _
        %s470 = sand.u32 %s35, 1
        %s471 = scalar_lea.sflag [#allocation6], %s470
        %s472 = sand.u32 %s95, 1
        %s473 = smul.addr %s472, 8
        %s474 = scalar_lea.vmem [#allocation7], %s473
        // Predicated region
        $region69: #{tpu_custom_call.1} parent=59 // pred_check
          %p475 = pneg %p108
        $region70: #{tpu_custom_call.1} parent=59 // pred_check_branch
          %477 = sbr.rel (%p475) target = $region72
        $region71: #{tpu_custom_call.1} parent=59 // pred_region
          %478 = dma.done %s471, 128
        $region72: #{tpu_custom_call.1} parent=59 // pred_fallthru
          _
        %s479 = sand.u32 %s35, 1
        %s480 = scalar_lea.sflag [#allocation9], %s479
        %s481 = sand.u32 %s121, 1
        %s482 = smul.addr %s481, 8
        %s483 = scalar_lea.vmem [#allocation8], %s482
        // Predicated region
        $region73: #{tpu_custom_call.1} parent=59 // pred_check
          %p484 = pneg %p134
        $region74: #{tpu_custom_call.1} parent=59 // pred_check_branch
          %486 = sbr.rel (%p484) target = $region76
        $region75: #{tpu_custom_call.1} parent=59 // pred_region
          %487 = dma.done %s480, 128
        $region76: #{tpu_custom_call.1} parent=59 // pred_fallthru
          _
        %s488 = sand.u32 %s35, 1
        %s489 = scalar_lea.sflag [#allocation9], %s488
        %s490 = sand.u32 %s147, 1
        %s491 = smul.addr %s490, 8
        %s492 = scalar_lea.vmem [#allocation10], %s491
        // Predicated region
        $region77: #{tpu_custom_call.1} parent=59 // pred_check
          %p493 = pneg %p160
        $region78: #{tpu_custom_call.1} parent=59 // pred_check_branch
          %495 = sbr.rel (%p493) target = $region80
        $region79: #{tpu_custom_call.1} parent=59 // pred_region
          %496 = dma.done %s489, 128
        $region80: #{tpu_custom_call.1} parent=59 // pred_fallthru
          _
        // Predicated region
        $region81: #{tpu_custom_call.1} parent=59 // pred_check
          %p497 = pneg %p202
        $region82: #{tpu_custom_call.1} parent=59 // pred_check_branch
          %499 = sbr.rel (%p497) target = $region84
        $region83: #{tpu_custom_call.1} parent=59 // pred_region
          %500 = dma.done [#allocation12], 512
        $region84: #{tpu_custom_call.1} parent=59 // pred_fallthru
          _
        // Predicated region
        $region85: #{tpu_custom_call.1} parent=59 // pred_check
          %p501 = pneg %p223
        $region86: #{tpu_custom_call.1} parent=59 // pred_check_branch
          %503 = sbr.rel (%p501) target = $region88
        $region87: #{tpu_custom_call.1} parent=59 // pred_region
          %504 = dma.done [#allocation12], 1024
        $region88: #{tpu_custom_call.1} parent=59 // pred_fallthru
          _
        // Predicated region
        $region89: #{tpu_custom_call.1} parent=59 // pred_check
          %p505 = pneg %p244
        $region90: #{tpu_custom_call.1} parent=59 // pred_check_branch
          %507 = sbr.rel (%p505) target = $region92
        $region91: #{tpu_custom_call.1} parent=59 // pred_region
          %508 = dma.done [#allocation15], 1024
        $region92: #{tpu_custom_call.1} parent=59 // pred_fallthru
          _
        %s509 = sand.u32 %s43, 1
        %s510 = scalar_lea.sflag [#allocation3], %s509
        %s511 = sand.u32 %s43, 1
        %s512 = smul.addr %s511, 8
        %s513 = scalar_lea.vmem [#allocation2], %s512
        %p514 = pneg %p56
        %p515 = pneg %p53
        %s516 = sand.u32 %s35, 1
        %s517 = scalar_lea.sflag [#allocation6], %s516
        %s518 = sand.u32 %s69, 1
        %s519 = smul.addr %s518, 8
        %s520 = scalar_lea.vmem [#allocation5], %s519
        %p521 = pneg %p82
        %p522 = pneg %p79
        %s523 = sand.u32 %s35, 1
        %s524 = scalar_lea.sflag [#allocation6], %s523
        %s525 = sand.u32 %s95, 1
        %s526 = smul.addr %s525, 8
        %s527 = scalar_lea.vmem [#allocation7], %s526
        %p528 = pneg %p108
        %p529 = pneg %p105
        %s530 = sand.u32 %s35, 1
        %s531 = scalar_lea.sflag [#allocation9], %s530
        %s532 = sand.u32 %s121, 1
        %s533 = smul.addr %s532, 8
        %s534 = scalar_lea.vmem [#allocation8], %s533
        %p535 = pneg %p134
        %p536 = pneg %p131
        %s537 = sand.u32 %s35, 1
        %s538 = scalar_lea.sflag [#allocation9], %s537
        %s539 = sand.u32 %s147, 1
        %s540 = smul.addr %s539, 8
        %s541 = scalar_lea.vmem [#allocation10], %s540
        %p542 = pneg %p160
        %p543 = pneg %p157
        %p544 = pneg %p181
        %p545 = pneg %p178
        %p546 = pneg %p202
        %p547 = pneg %p199
        %p548 = pneg %p223
        %p549 = pneg %p220
        %p550 = pneg %p244
        %p551 = pneg %p241
        %p552 = pneg %p265
        %p553 = pneg %p262
        %p554 = pneg %p291
        %p555 = pneg %p288
        %s556 = sand.u32 %s278, 1
        %s557 = scalar_lea.sflag [#allocation4], %s556
        %s558 = sand.u32 %s278, 1
        %s559 = smul.addr %s558, 4
        %s560 = scalar_lea.vmem [#allocation16], %s559
        %v562 = vld [vmem:[%s465] sm:$0xff]
        %v563 = vpack.c.bf16 %v562, %v562
        %v564 = vld [vmem:[%s5] sm:$0xf]
        %v565 = vld [vmem:[%s5 + $0x4] sm:$0xf]
        %v566 = vld [vmem:[%s5 + $0x8] sm:$0xf]
        %v567 = vld [vmem:[%s5 + $0xc] sm:$0xf]
        %v568 = vld [vmem:[%s474] sm:$0xff]
        %v569 = vpack.c.bf16 %v568, %v568
        %v570 = vld [vmem:[#allocation11] sm:$0xf]
        %v571 = vld [vmem:[#allocation11 + $0x4] sm:$0xf]
        %v572 = vld [vmem:[#allocation11 + $0x8] sm:$0xf]
        %v573 = vld [vmem:[#allocation11 + $0xc] sm:$0xf]
        %v574 = vld [vmem:[#allocation11 + $0x10] sm:$0xf]
        %v575 = vld [vmem:[#allocation11 + $0x14] sm:$0xf]
        %v576 = vld [vmem:[#allocation11 + $0x18] sm:$0xf]
        %v577 = vld [vmem:[#allocation11 + $0x1c] sm:$0xf]
        %v586 = vunpack.c.l.b16 %v570
        %v587 = vunpack.c.l.b16 %v571
        %v588 = vunpack.c.l.b16 %v572
        %v589 = vunpack.c.l.b16 %v573
        %v590 = vunpack.c.l.b16 %v574
        %v591 = vunpack.c.l.b16 %v575
        %v592 = vunpack.c.l.b16 %v576
        %v593 = vunpack.c.l.b16 %v577
        %v594 = vpack.c.b16 %v587, %v586
        %v595 = vpack.c.b16 %v589, %v588
        %v596 = vpack.c.b16 %v591, %v590
        %v597 = vpack.c.b16 %v593, %v592
        %vm602 = vcmask 523264
        %v604 = vsel %vm602, %v569, 0
        %606 = vmatprep.subr.bf16.mxu0 0
        %607 = vmatpush1.bf16.msra.mxu0 %v594
        %608 = vmatprep.subr.bf16.mxu0 0
        %609 = vmatpush1.bf16.msra.mxu0 %v595
        %610 = vmatprep.subr.bf16.mxu0 0
        %611 = vmatpush1.bf16.msra.mxu0 %v596
        %612 = vmatprep.subr.bf16.mxu0 0
        %613 = vmatpush1.bf16.msra.mxu0 %v597
        %614 = vmatprep.subr.bf16.mxu0 0
        %615 = vmatpush1.bf16.msra.mxu0 0
        %616 = vmatprep.subr.bf16.mxu0 0
        %617 = vmatpush1.bf16.msra.mxu0 0
        %618 = vmatprep.subr.bf16.mxu0 0
        %619 = vmatpush1.bf16.msra.mxu0 0
        %620 = vmatprep.subr.bf16.mxu0 0
        %621 = vmatpush1.bf16.msra.mxu0 0
        %622 = vmatprep.subr.bf16.mxu0 0
        %623 = vmatpush1.bf16.msra.mxu0 0
        %624 = vmatprep.subr.bf16.mxu0 0
        %625 = vmatpush1.bf16.msra.mxu0 0
        %626 = vmatprep.subr.bf16.mxu0 0
        %627 = vmatpush1.bf16.msra.mxu0 0
        %628 = vmatprep.subr.bf16.mxu0 0
        %629 = vmatpush1.bf16.msra.mxu0 0
        %630 = vmatprep.subr.bf16.mxu0 0
        %631 = vmatpush1.bf16.msra.mxu0 0
        %632 = vmatprep.subr.bf16.mxu0 0
        %633 = vmatpush1.bf16.msra.mxu0 0
        %634 = vmatprep.subr.bf16.mxu0 0
        %635 = vmatpush1.bf16.msra.mxu0 0
        %636 = vmatprep.subr.bf16.mxu0 0
        %637 = vmatpush1.bf16.msra.mxu0 0
        %638 = vmatprep.mubr.bf16.mxu0 0
        %639 = vmatmul.mubr.bf16.gmra.mrb[0].mxu0 %v604
        %v640 = vpop.f32.mrb[0].mxu0
        %v641 = vadd.f32 0.0, %v640
        %v642 = vpop.f32.mrb[0].mxu0
        %v643 = vpop.f32.mrb[0].mxu0
        %v644 = vpop.f32.mrb[0].mxu0
        %645 = vdwg.mxu0
        %v650 = vunpack.c.l.b16 %v564
        %v651 = vunpack.c.l.b16 %v565
        %v652 = vunpack.c.l.b16 %v566
        %v653 = vunpack.c.l.b16 %v567
        %v654 = vpack.c.b16 %v651, %v650
        %v655 = vpack.c.b16 %v653, %v652
        %vm658 = vcmask 261120
        %v660 = vsel %vm658, %v563, 0
        %662 = vmatprep.subr.bf16.mxu0 0
        %663 = vmatpush1.bf16.msra.mxu0 %v654
        %664 = vmatprep.subr.bf16.mxu0 0
        %665 = vmatpush1.bf16.msra.mxu0 %v655
        %666 = vmatprep.subr.bf16.mxu0 0
        %667 = vmatpush1.bf16.msra.mxu0 0
        %668 = vmatprep.subr.bf16.mxu0 0
        %669 = vmatpush1.bf16.msra.mxu0 0
        %670 = vmatprep.subr.bf16.mxu0 0
        %671 = vmatpush1.bf16.msra.mxu0 0
        %672 = vmatprep.subr.bf16.mxu0 0
        %673 = vmatpush1.bf16.msra.mxu0 0
        %674 = vmatprep.subr.bf16.mxu0 0
        %675 = vmatpush1.bf16.msra.mxu0 0
        %676 = vmatprep.subr.bf16.mxu0 0
        %677 = vmatpush1.bf16.msra.mxu0 0
        %678 = vmatprep.subr.bf16.mxu0 0
        %679 = vmatpush1.bf16.msra.mxu0 0
        %680 = vmatprep.subr.bf16.mxu0 0
        %681 = vmatpush1.bf16.msra.mxu0 0
        %682 = vmatprep.subr.bf16.mxu0 0
        %683 = vmatpush1.bf16.msra.mxu0 0
        %684 = vmatprep.subr.bf16.mxu0 0
        %685 = vmatpush1.bf16.msra.mxu0 0
        %686 = vmatprep.subr.bf16.mxu0 0
        %687 = vmatpush1.bf16.msra.mxu0 0
        %688 = vmatprep.subr.bf16.mxu0 0
        %689 = vmatpush1.bf16.msra.mxu0 0
        %690 = vmatprep.subr.bf16.mxu0 0
        %691 = vmatpush1.bf16.msra.mxu0 0
        %692 = vmatprep.subr.bf16.mxu0 0
        %693 = vmatpush1.bf16.msra.mxu0 0
        %694 = vmatprep.mubr.bf16.mxu0 0
        %695 = vmatmul.mubr.bf16.gmra.mrb[0].mxu0 %v660
        %v696 = vpop.f32.mrb[0].mxu0
        %v697 = vadd.f32 %v641, %v696
        %v698 = vpop.f32.mrb[0].mxu0
        %v699 = vpop.f32.mrb[0].mxu0
        %v700 = vpop.f32.mrb[0].mxu0
        %701 = vdwg.mxu0
        %v702 = vld [vmem:[%s9] sm:$0x1]
        %v703 = vlaneseq
        %v704 = vshrl.u32 %v703, 7
        %v705 = vsub.s32 0, %v704
        %v706 = vrot.slane %v702, %v705
        %v707 = vadd.f32 %v697, %v706
        %v708 = vld [vmem:[%s483] sm:$0xff]
        %v709 = vld [vmem:[%s492] sm:$0xff]
        %v710 = vadd.f32 %v708, %v709
        %v711 = vpack.c.bf16 %v710, %v710
        %v712 = vld [vmem:[#allocation13] sm:$0xf]
        %v713 = vld [vmem:[#allocation13 + $0x4] sm:$0xf]
        %v714 = vld [vmem:[#allocation13 + $0x8] sm:$0xf]
        %v715 = vld [vmem:[#allocation13 + $0xc] sm:$0xf]
        %v716 = vld [vmem:[#allocation13 + $0x10] sm:$0xf]
        %v717 = vld [vmem:[#allocation13 + $0x14] sm:$0xf]
        %v718 = vld [vmem:[#allocation13 + $0x18] sm:$0xf]
        %v719 = vld [vmem:[#allocation13 + $0x1c] sm:$0xf]
        %v720 = vld [vmem:[#allocation13 + $0x20] sm:$0xf]
        %v721 = vld [vmem:[#allocation13 + $0x24] sm:$0xf]
        %v722 = vld [vmem:[#allocation13 + $0x28] sm:$0xf]
        %v723 = vld [vmem:[#allocation13 + $0x2c] sm:$0xf]
        %v724 = vld [vmem:[#allocation13 + $0x30] sm:$0xf]
        %v725 = vld [vmem:[#allocation13 + $0x34] sm:$0xf]
        %v726 = vld [vmem:[#allocation13 + $0x38] sm:$0xf]
        %v727 = vld [vmem:[#allocation13 + $0x3c] sm:$0xf]
        %v744 = vunpack.c.l.b16 %v712
        %v745 = vunpack.c.l.b16 %v713
        %v746 = vunpack.c.l.b16 %v714
        %v747 = vunpack.c.l.b16 %v715
        %v748 = vunpack.c.l.b16 %v716
        %v749 = vunpack.c.l.b16 %v717
        %v750 = vunpack.c.l.b16 %v718
        %v751 = vunpack.c.l.b16 %v719
        %v752 = vunpack.c.l.b16 %v720
        %v753 = vunpack.c.l.b16 %v721
        %v754 = vunpack.c.l.b16 %v722
        %v755 = vunpack.c.l.b16 %v723
        %v756 = vunpack.c.l.b16 %v724
        %v757 = vunpack.c.l.b16 %v725
        %v758 = vunpack.c.l.b16 %v726
        %v759 = vunpack.c.l.b16 %v727
        %v760 = vpack.c.b16 %v745, %v744
        %v761 = vpack.c.b16 %v747, %v746
        %v762 = vpack.c.b16 %v749, %v748
        %v763 = vpack.c.b16 %v751, %v750
        %v764 = vpack.c.b16 %v753, %v752
        %v765 = vpack.c.b16 %v755, %v754
        %v766 = vpack.c.b16 %v757, %v756
        %v767 = vpack.c.b16 %v759, %v758
        %776 = vmatprep.subr.bf16.mxu0 0
        %777 = vmatpush1.bf16.msra.mxu0 %v760
        %778 = vmatprep.subr.bf16.mxu0 0
        %779 = vmatpush1.bf16.msra.mxu0 %v761
        %780 = vmatprep.subr.bf16.mxu0 0
        %781 = vmatpush1.bf16.msra.mxu0 %v762
        %782 = vmatprep.subr.bf16.mxu0 0
        %783 = vmatpush1.bf16.msra.mxu0 %v763
        %784 = vmatprep.subr.bf16.mxu0 0
        %785 = vmatpush1.bf16.msra.mxu0 %v764
        %786 = vmatprep.subr.bf16.mxu0 0
        %787 = vmatpush1.bf16.msra.mxu0 %v765
        %788 = vmatprep.subr.bf16.mxu0 0
        %789 = vmatpush1.bf16.msra.mxu0 %v766
        %790 = vmatprep.subr.bf16.mxu0 0
        %791 = vmatpush1.bf16.msra.mxu0 %v767
        %792 = vmatprep.subr.bf16.mxu0 0
        %793 = vmatpush1.bf16.msra.mxu0 0
        %794 = vmatprep.subr.bf16.mxu0 0
        %795 = vmatpush1.bf16.msra.mxu0 0
        %796 = vmatprep.subr.bf16.mxu0 0
        %797 = vmatpush1.bf16.msra.mxu0 0
        %798 = vmatprep.subr.bf16.mxu0 0
        %799 = vmatpush1.bf16.msra.mxu0 0
        %800 = vmatprep.subr.bf16.mxu0 0
        %801 = vmatpush1.bf16.msra.mxu0 0
        %802 = vmatprep.subr.bf16.mxu0 0
        %803 = vmatpush1.bf16.msra.mxu0 0
        %804 = vmatprep.subr.bf16.mxu0 0
        %805 = vmatpush1.bf16.msra.mxu0 0
        %806 = vmatprep.subr.bf16.mxu0 0
        %807 = vmatpush1.bf16.msra.mxu0 0
        %808 = vmatprep.mubr.bf16.mxu0 0
        %809 = vmatmul.mubr.bf16.gmra.mrb[0].mxu0 %v711
        %v810 = vpop.f32.mrb[0].mxu0
        %v811 = vadd.f32 0.0, %v810
        %v812 = vpop.f32.mrb[0].mxu0
        %v813 = vpop.f32.mrb[0].mxu0
        %v814 = vpop.f32.mrb[0].mxu0
        %815 = vdwg.mxu0
        %v816 = vld [vmem:[%s456] sm:$0xff]
        %v817 = vmul.f32 %v816, %v707
        %v818 = vadd.f32 %v817, %v811
        %v819 = vpack.c.bf16 %v818, %v818
        %v820 = vld [vmem:[#allocation14] sm:$0xf]
        %v821 = vld [vmem:[#allocation14 + $0x4] sm:$0xf]
        %v822 = vld [vmem:[#allocation14 + $0x8] sm:$0xf]
        %v823 = vld [vmem:[#allocation14 + $0xc] sm:$0xf]
        %v824 = vld [vmem:[#allocation14 + $0x10] sm:$0xf]
        %v825 = vld [vmem:[#allocation14 + $0x14] sm:$0xf]
        %v826 = vld [vmem:[#allocation14 + $0x18] sm:$0xf]
        %v827 = vld [vmem:[#allocation14 + $0x1c] sm:$0xf]
        %v828 = vld [vmem:[#allocation14 + $0x20] sm:$0xf]
        %v829 = vld [vmem:[#allocation14 + $0x24] sm:$0xf]
        %v830 = vld [vmem:[#allocation14 + $0x28] sm:$0xf]
        %v831 = vld [vmem:[#allocation14 + $0x2c] sm:$0xf]
        %v832 = vld [vmem:[#allocation14 + $0x30] sm:$0xf]
        %v833 = vld [vmem:[#allocation14 + $0x34] sm:$0xf]
        %v834 = vld [vmem:[#allocation14 + $0x38] sm:$0xf]
        %v835 = vld [vmem:[#allocation14 + $0x3c] sm:$0xf]
        %v836 = vld [vmem:[%s9 + $0x1] sm:$0x1]
        %v837 = vlaneseq
        %v838 = vshrl.u32 %v837, 7
        %v839 = vsub.s32 0, %v838
        %v840 = vrot.slane %v836, %v839
        %v857 = vunpack.c.l.b16 %v820
        %v858 = vunpack.c.l.b16 %v821
        %v859 = vunpack.c.l.b16 %v822
        %v860 = vunpack.c.l.b16 %v823
        %v861 = vunpack.c.l.b16 %v824
        %v862 = vunpack.c.l.b16 %v825
        %v863 = vunpack.c.l.b16 %v826
        %v864 = vunpack.c.l.b16 %v827
        %v865 = vunpack.c.l.b16 %v828
        %v866 = vunpack.c.l.b16 %v829
        %v867 = vunpack.c.l.b16 %v830
        %v868 = vunpack.c.l.b16 %v831
        %v869 = vunpack.c.l.b16 %v832
        %v870 = vunpack.c.l.b16 %v833
        %v871 = vunpack.c.l.b16 %v834
        %v872 = vunpack.c.l.b16 %v835
        %v873 = vpack.c.b16 %v858, %v857
        %v874 = vpack.c.b16 %v860, %v859
        %v875 = vpack.c.b16 %v862, %v861
        %v876 = vpack.c.b16 %v864, %v863
        %v877 = vpack.c.b16 %v866, %v865
        %v878 = vpack.c.b16 %v868, %v867
        %v879 = vpack.c.b16 %v870, %v869
        %v880 = vpack.c.b16 %v872, %v871
        %889 = vmatprep.subr.bf16.mxu0 0
        %890 = vmatpush1.bf16.msra.mxu0 %v873
        %891 = vmatprep.subr.bf16.mxu0 0
        %892 = vmatpush1.bf16.msra.mxu0 %v874
        %893 = vmatprep.subr.bf16.mxu0 0
        %894 = vmatpush1.bf16.msra.mxu0 %v875
        %895 = vmatprep.subr.bf16.mxu0 0
        %896 = vmatpush1.bf16.msra.mxu0 %v876
        %897 = vmatprep.subr.bf16.mxu0 0
        %898 = vmatpush1.bf16.msra.mxu0 %v877
        %899 = vmatprep.subr.bf16.mxu0 0
        %900 = vmatpush1.bf16.msra.mxu0 %v878
        %901 = vmatprep.subr.bf16.mxu0 0
        %902 = vmatpush1.bf16.msra.mxu0 %v879
        %903 = vmatprep.subr.bf16.mxu0 0
        %904 = vmatpush1.bf16.msra.mxu0 %v880
        %905 = vmatprep.subr.bf16.mxu0 0
        %906 = vmatpush1.bf16.msra.mxu0 0
        %907 = vmatprep.subr.bf16.mxu0 0
        %908 = vmatpush1.bf16.msra.mxu0 0
        %909 = vmatprep.subr.bf16.mxu0 0
        %910 = vmatpush1.bf16.msra.mxu0 0
        %911 = vmatprep.subr.bf16.mxu0 0
        %912 = vmatpush1.bf16.msra.mxu0 0
        %913 = vmatprep.subr.bf16.mxu0 0
        %914 = vmatpush1.bf16.msra.mxu0 0
        %915 = vmatprep.subr.bf16.mxu0 0
        %916 = vmatpush1.bf16.msra.mxu0 0
        %917 = vmatprep.subr.bf16.mxu0 0
        %918 = vmatpush1.bf16.msra.mxu0 0
        %919 = vmatprep.subr.bf16.mxu0 0
        %920 = vmatpush1.bf16.msra.mxu0 0
        %921 = vmatprep.mubr.bf16.mxu0 0
        %922 = vmatmul.mubr.bf16.gmra.mrb[0].mxu0 %v819
        %v923 = vpop.f32.mrb[0].mxu0
        %v924 = vadd.f32 %v840, %v923
        %v925 = vpop.f32.mrb[0].mxu0
        %v926 = vpop.f32.mrb[0].mxu0
        %v927 = vpop.f32.mrb[0].mxu0
        %928 = vdwg.mxu0
        %v929 = vpack.c.bf16 %v924, %v924
        %930 = vst [vmem:[%s560] sm:$0xf] %v929
        %s931 = sand.u32 %s278, 1
        %s932 = scalar_lea.sflag [#allocation4], %s931
        %s933 = sand.u32 %s278, 1
        %s934 = smul.addr %s933, 4
        %s935 = scalar_lea.vmem [#allocation16], %s934
        // Predicated region
        $region93: #{tpu_custom_call.1} parent=59 // pred_check
          %p936 = pneg %p288
        $region94: #{tpu_custom_call.1} parent=59 // pred_check_branch
          %938 = sbr.rel (%p936) target = $region96
        $region95: #{tpu_custom_call.1} parent=59 // pred_region
          %s940 = ssub.s32 64, 64
          %941 = vsyncadd %s932, %s940
          %s942 = smul.addr %s35, 64
          %s943 = scalar_lea.hbm %s10, %s942
          %s945 = sshll.u32 %s935, 4
          %s946 = int_to_ptr.vmem [resolvable:$true] %s945
          %948 = dma.vmem_to_hbm [thread:$0]  %s946, 64, %s943, %s932
        $region96: #{tpu_custom_call.1} parent=59 // pred_fallthru
          _
      $region60: #{tpu_custom_call.1} parent=5 // pred_fallthru
        _
      %p949 = scmp.le.s32.totalorder 2, %s30
      // Predicated region
      $region97: #{tpu_custom_call.1} parent=5 // pred_check
        %p950 = pneg %p949
      $region98: #{tpu_custom_call.1} parent=5 // pred_check_branch
        %952 = sbr.rel (%p950) target = $region100
      $region99: #{tpu_custom_call.1} parent=5 // pred_region
        %s953 = ssub.s32 %s30, 2
        // Predicated region
        $region101: #{tpu_custom_call.1} parent=99 // pred_check
          %p954 = pneg %p294
        $region102: #{tpu_custom_call.1} parent=99 // pred_check_branch
          %956 = sbr.rel (%p954) target = $region104
        $region103: #{tpu_custom_call.1} parent=99 // pred_region
          %s957 = sand.u32 %s279, 1
          %s958 = scalar_lea.sflag [#allocation4], %s957
          %s959 = sand.u32 %s279, 1
          %s960 = smul.addr %s959, 4
          %s961 = scalar_lea.vmem [#allocation16], %s960
          %962 = dma.done %s958, 64
        $region104: #{tpu_custom_call.1} parent=99 // pred_fallthru
          _
      $region100: #{tpu_custom_call.1} parent=5 // pred_fallthru
        _
    $region6: #{tpu_custom_call.1} parent=1 // loop_footer
      %s34 = sadd.s32 1, %s30
    $region7: #{tpu_custom_call.1} parent=1 // loop_footer_branch
      %29 = sbr.rel target = $region3
    $region8: #{tpu_custom_call.1} parent=1 // loop_exit
      _
    %963 = vsyncpa [#allocation3], 1
    %s964 = scalar_lea.sflag [#allocation3], 1
    %965 = vsyncpa %s964, 1
    %966 = vsyncpa [#allocation6], 1
    %s967 = scalar_lea.sflag [#allocation6], 1
    %968 = vsyncpa %s967, 1
    %969 = vsyncpa [#allocation9], 1
    %s970 = scalar_lea.sflag [#allocation9], 1
    %971 = vsyncpa %s970, 1
    %972 = vsyncpa [#allocation12], 1
    %973 = vsyncpa [#allocation15], 1
    %974 = vsyncpa [#allocation4], 1
    %s975 = scalar_lea.sflag [#allocation4], 1
    %976 = vsyncpa %s975, 1

// kernel: tpu_custom_call.1
$region0: #{tpu_custom_call.1}
  #allocation0 [shape = 'u32[]', space=smem, size = 0x4, offset = 0x4, fixed_abs, tag = 'smem constant byte address 0x4 - core index']
  #allocation1 [shape = 'u32[144,128]{1,0:T(1,128)}', space=vmem, size = 0x12000, scoped, tag = 'internal scratch']
  %s0 = inlined_call_operand.hbm [shape: f32[16,128], index: 0, kind: input, shape index: {}]
  %s1 = inlined_call_operand.hbm [shape: f32[16,32], index: 1, kind: input, shape index: {}]
  %s2 = inlined_call_operand.hbm [shape: f32[16,64], index: 2, kind: input, shape index: {}]
  %s3 = inlined_call_operand.hbm [shape: f32[16,128], index: 3, kind: input, shape index: {}]
  %s4 = inlined_call_operand.hbm [shape: f32[16,128], index: 4, kind: input, shape index: {}]
  %s5 = inlined_call_operand.vmem [shape: bf16[32,128], index: 5, kind: input, shape index: {}]
  %s6 = inlined_call_operand.hbm [shape: bf16[64,128], index: 6, kind: input, shape index: {}]
  %s7 = inlined_call_operand.hbm [shape: bf16[128,128], index: 7, kind: input, shape index: {}]
  %s8 = inlined_call_operand.hbm [shape: bf16[128,128], index: 8, kind: input, shape index: {}]
  %s9 = inlined_call_operand.vmem [shape: f32[2,128], index: 9, kind: input, shape index: {}]
  %s10 = inlined_call_operand.hbm [shape: bf16[16,128], index: 10, kind: output, shape index: {}]
  %s11 = sld [smem:[#allocation0]]
  $region105: #{tpu_custom_call.1} parent=0
    _
  %s13 = ssub.s32 1, %s11
  %s14 = scalar_select 0, %s13, %s11
  $region1: #{tpu_custom_call.1} parent=0
    #allocation2 [shape = 'u8[8192]{0}', space=vmem, size = 0x2000, scoped, tag = 'input window, operand 0']
    #allocation3 [shape = 's32[2]{0}', space=sflag, size = 0x8, scoped, tag = 'scoped memory for tpu_custom_call.1']
    #allocation4 [shape = 's32[2]{0}', space=sflag, size = 0x8, scoped, tag = 'scoped memory for tpu_custom_call.1']
    #allocation5 [shape = 'u8[8192]{0}', space=vmem, size = 0x2000, scoped, tag = 'input window, operand 1']
    #allocation6 [shape = 's32[2]{0}', space=sflag, size = 0x8, scoped, tag = 'scoped memory for tpu_custom_call.1']
    #allocation7 [shape = 'u8[8192]{0}', space=vmem, size = 0x2000, scoped, tag = 'input window, operand 2']
    #allocation8 [shape = 'u8[8192]{0}', space=vmem, size = 0x2000, scoped, tag = 'input window, operand 3']
    #allocation9 [shape = 's32[2]{0}', space=sflag, size = 0x8, scoped, tag = 'scoped memory for tpu_custom_call.1']
    #allocation10 [shape = 'u8[8192]{0}', space=vmem, size = 0x2000, scoped, tag = 'input window, operand 4']
    #allocation11 [shape = 'u8[16384]{0}', space=vmem, size = 0x4000, scoped, tag = 'input window, operand 6, single buffered']
    #allocation12 [shape = 's32[1]{0}', space=sflag, size = 0x4, scoped, tag = 'scoped memory for tpu_custom_call.1']
    #allocation13 [shape = 'u8[32768]{0}', space=vmem, size = 0x8000, scoped, tag = 'input window, operand 7, single buffered']
    #allocation14 [shape = 'u8[32768]{0}', space=vmem, size = 0x8000, scoped, tag = 'input window, operand 8, single buffered']
    #allocation15 [shape = 's32[1]{0}', space=sflag, size = 0x4, scoped, tag = 'scoped memory for tpu_custom_call.1']
    #allocation16 [shape = 'u8[4096]{0}', space=vmem, size = 0x1000, scoped, tag = 'output window, operand 0']
    %15 = vsyncpa [#allocation3], 0
    %s16 = scalar_lea.sflag [#allocation3], 1
    %17 = vsyncpa %s16, 0
    %18 = vsyncpa [#allocation6], 0
    %s19 = scalar_lea.sflag [#allocation6], 1
    %20 = vsyncpa %s19, 0
    %21 = vsyncpa [#allocation9], 0
    %s22 = scalar_lea.sflag [#allocation9], 1
    %23 = vsyncpa %s22, 0
    %24 = vsyncpa [#allocation12], 0
    %25 = vsyncpa [#allocation15], 0
    %26 = vsyncpa [#allocation4], 0
    %s27 = scalar_lea.sflag [#allocation4], 1
    %28 = vsyncpa %s27, 0
    loop: start=0, step=1, limit=4
    $region2: #{tpu_custom_call.1} parent=1 // loop_pre_header
      _
    $region3: #{tpu_custom_call.1} parent=1 // loop_header
      %s30 = sphi 0, %s34
      %p31 = scmp.ge.s32.totalorder %s30, 4
      %s40 = sphi 0, %s42
      %s43 = sphi 0, %s40
      %s44 = sphi 0, %s43
      %s60 = sphi 0, %s44
      %s66 = sphi 0, %s68
      %s69 = sphi 0, %s66
      %s70 = sphi 0, %s69
      %s86 = sphi 0, %s70
      %s92 = sphi 0, %s94
      %s95 = sphi 0, %s92
      %s96 = sphi 0, %s95
      %s112 = sphi 0, %s96
      %s118 = sphi 0, %s120
      %s121 = sphi 0, %s118
      %s122 = sphi 0, %s121
      %s138 = sphi 0, %s122
      %s144 = sphi 0, %s146
      %s147 = sphi 0, %s144
      %s148 = sphi 0, %s147
      %s164 = sphi 0, %s148
      %s168 = sphi 0, %s168
      %s170 = sphi 0, %s168
      %s171 = sphi 0, %s170
      %s185 = sphi 0, %s171
      %s189 = sphi 0, %s189
      %s191 = sphi 0, %s189
      %s192 = sphi 0, %s191
      %s206 = sphi 0, %s192
      %s210 = sphi 0, %s210
      %s212 = sphi 0, %s210
      %s213 = sphi 0, %s212
      %s227 = sphi 0, %s213
      %s231 = sphi 0, %s231
      %s233 = sphi 0, %s231
      %s234 = sphi 0, %s233
      %s248 = sphi 0, %s234
      %s252 = sphi 0, %s252
      %s254 = sphi 0, %s252
      %s255 = sphi 0, %s254
      %s269 = sphi 0, %s255
      %s275 = sphi 0, %s277
      %s278 = sphi 0, %s275
      %s279 = sphi 0, %s278
      %s295 = sphi 0, %s279
    $region4: #{tpu_custom_call.1} parent=1 // loop_header_branch
      %33 = sbr.rel (%p31) target = $region8
    $region5: #{tpu_custom_call.1} parent=1 // loop_body
      %s35 = ssub.s32 %s30, 1
      %s36 = ssub.s32 %s30, 2
      %s37 = sadd.s32 %s30, 1
      %s38 = ssub.s32 %s30, %s37
      %p39 = scmp.eq.s32.totalorder %s38, 0
      %s41 = sadd.s32 %s40, 1
      %s42 = scalar_select %p39, %s40, %s41
      %p45 = pneg %p39
      %p46 = scmp.eq.s32.totalorder %s30, 1
      %p47 = por %p45, %p46
      %p48 = scmp.ne.s32.totalorder %s40, %s43
      %p49 = scmp.eq.s32.totalorder %s30, 0
      %p50 = por %p48, %p49
      %p51 = scmp.ne.s32.totalorder %s40, %s43
      %p52 = scmp.eq.s32.totalorder %s35, 1
      %p53 = por %p51, %p52
      %p54 = scmp.ne.s32.totalorder %s43, %s44
      %p55 = scmp.eq.s32.totalorder %s35, 0
      %p56 = por %p54, %p55
      %p57 = scmp.ne.s32.totalorder %s43, %s44
      %p58 = scmp.eq.s32.totalorder %s36, 1
      %p59 = por %p57, %p58
      %p61 = scmp.ne.s32.totalorder %s44, %s60
      %p62 = scmp.eq.s32.totalorder %s36, 0
      %p63 = por %p61, %p62
      %s64 = ssub.s32 %s30, %s37
      %p65 = scmp.eq.s32.totalorder %s64, 0
      %s67 = sadd.s32 %s66, 1
      %s68 = scalar_select %p65, %s66, %s67
      %p71 = pneg %p65
      %p72 = scmp.eq.s32.totalorder %s30, 1
      %p73 = por %p71, %p72
      %p74 = scmp.ne.s32.totalorder %s66, %s69
      %p75 = scmp.eq.s32.totalorder %s30, 0
      %p76 = por %p74, %p75
      %p77 = scmp.ne.s32.totalorder %s66, %s69
      %p78 = scmp.eq.s32.totalorder %s35, 1
      %p79 = por %p77, %p78
      %p80 = scmp.ne.s32.totalorder %s69, %s70
      %p81 = scmp.eq.s32.totalorder %s35, 0
      %p82 = por %p80, %p81
      %p83 = scmp.ne.s32.totalorder %s69, %s70
      %p84 = scmp.eq.s32.totalorder %s36, 1
      %p85 = por %p83, %p84
      %p87 = scmp.ne.s32.totalorder %s70, %s86
      %p88 = scmp.eq.s32.totalorder %s36, 0
      %p89 = por %p87, %p88
      %s90 = ssub.s32 %s30, %s37
      %p91 = scmp.eq.s32.totalorder %s90, 0
      %s93 = sadd.s32 %s92, 1
      %s94 = scalar_select %p91, %s92, %s93
      %p97 = pneg %p91
      %p98 = scmp.eq.s32.totalorder %s30, 1
      %p99 = por %p97, %p98
      %p100 = scmp.ne.s32.totalorder %s92, %s95
      %p101 = scmp.eq.s32.totalorder %s30, 0
      %p102 = por %p100, %p101
      %p103 = scmp.ne.s32.totalorder %s92, %s95
      %p104 = scmp.eq.s32.totalorder %s35, 1
      %p105 = por %p103, %p104
      %p106 = scmp.ne.s32.totalorder %s95, %s96
      %p107 = scmp.eq.s32.totalorder %s35, 0
      %p108 = por %p106, %p107
      %p109 = scmp.ne.s32.totalorder %s95, %s96
      %p110 = scmp.eq.s32.totalorder %s36, 1
      %p111 = por %p109, %p110
      %p113 = scmp.ne.s32.totalorder %s96, %s112
      %p114 = scmp.eq.s32.totalorder %s36, 0
      %p115 = por %p113, %p114
      %s116 = ssub.s32 %s30, %s37
      %p117 = scmp.eq.s32.totalorder %s116, 0
      %s119 = sadd.s32 %s118, 1
      %s120 = scalar_select %p117, %s118, %s119
      %p123 = pneg %p117
      %p124 = scmp.eq.s32.totalorder %s30, 1
      %p125 = por %p123, %p124
      %p126 = scmp.ne.s32.totalorder %s118, %s121
      %p127 = scmp.eq.s32.totalorder %s30, 0
      %p128 = por %p126, %p127
      %p129 = scmp.ne.s32.totalorder %s118, %s121
      %p130 = scmp.eq.s32.totalorder %s35, 1
      %p131 = por %p129, %p130
      %p132 = scmp.ne.s32.totalorder %s121, %s122
      %p133 = scmp.eq.s32.totalorder %s35, 0
      %p134 = por %p132, %p133
      %p135 = scmp.ne.s32.totalorder %s121, %s122
      %p136 = scmp.eq.s32.totalorder %s36, 1
      %p137 = por %p135, %p136
      %p139 = scmp.ne.s32.totalorder %s122, %s138
      %p140 = scmp.eq.s32.totalorder %s36, 0
      %p141 = por %p139, %p140
      %s142 = ssub.s32 %s30, %s37
      %p143 = scmp.eq.s32.totalorder %s142, 0
      %s145 = sadd.s32 %s144, 1
      %s146 = scalar_select %p143, %s144, %s145
      %p149 = pneg %p143
      %p150 = scmp.eq.s32.totalorder %s30, 1
      %p151 = por %p149, %p150
      %p152 = scmp.ne.s32.totalorder %s144, %s147
      %p153 = scmp.eq.s32.totalorder %s30, 0
      %p154 = por %p152, %p153
      %p155 = scmp.ne.s32.totalorder %s144, %s147
      %p156 = scmp.eq.s32.totalorder %s35, 1
      %p157 = por %p155, %p156
      %p158 = scmp.ne.s32.totalorder %s147, %s148
      %p159 = scmp.eq.s32.totalorder %s35, 0
      %p160 = por %p158, %p159
      %p161 = scmp.ne.s32.totalorder %s147, %s148
      %p162 = scmp.eq.s32.totalorder %s36, 1
      %p163 = por %p161, %p162
      %p165 = scmp.ne.s32.totalorder %s148, %s164
      %p166 = scmp.eq.s32.totalorder %s36, 0
      %p167 = por %p165, %p166
      %s169 = sadd.s32 %s168, 1
      %p172 = scmp.eq.s32.totalorder %s30, 1
      %p173 = scmp.ne.s32.totalorder %s168, %s170
      %p174 = scmp.eq.s32.totalorder %s30, 0
      %p175 = por %p173, %p174
      %p176 = scmp.ne.s32.totalorder %s168, %s170
      %p177 = scmp.eq.s32.totalorder %s35, 1
      %p178 = por %p176, %p177
      %p179 = scmp.ne.s32.totalorder %s170, %s171
      %p180 = scmp.eq.s32.totalorder %s35, 0
      %p181 = por %p179, %p180
      %p182 = scmp.ne.s32.totalorder %s170, %s171
      %p183 = scmp.eq.s32.totalorder %s36, 1
      %p184 = por %p182, %p183
      %p186 = scmp.ne.s32.totalorder %s171, %s185
      %p187 = scmp.eq.s32.totalorder %s36, 0
      %p188 = por %p186, %p187
      %s190 = sadd.s32 %s189, 1
      %p193 = scmp.eq.s32.totalorder %s30, 1
      %p194 = scmp.ne.s32.totalorder %s189, %s191
      %p195 = scmp.eq.s32.totalorder %s30, 0
      %p196 = por %p194, %p195
      %p197 = scmp.ne.s32.totalorder %s189, %s191
      %p198 = scmp.eq.s32.totalorder %s35, 1
      %p199 = por %p197, %p198
      %p200 = scmp.ne.s32.totalorder %s191, %s192
      %p201 = scmp.eq.s32.totalorder %s35, 0
      %p202 = por %p200, %p201
      %p203 = scmp.ne.s32.totalorder %s191, %s192
      %p204 = scmp.eq.s32.totalorder %s36, 1
      %p205 = por %p203, %p204
      %p207 = scmp.ne.s32.totalorder %s192, %s206
      %p208 = scmp.eq.s32.totalorder %s36, 0
      %p209 = por %p207, %p208
      %s211 = sadd.s32 %s210, 1
      %p214 = scmp.eq.s32.totalorder %s30, 1
      %p215 = scmp.ne.s32.totalorder %s210, %s212
      %p216 = scmp.eq.s32.totalorder %s30, 0
      %p217 = por %p215, %p216
      %p218 = scmp.ne.s32.totalorder %s210, %s212
      %p219 = scmp.eq.s32.totalorder %s35, 1
      %p220 = por %p218, %p219
      %p221 = scmp.ne.s32.totalorder %s212, %s213
      %p222 = scmp.eq.s32.totalorder %s35, 0
      %p223 = por %p221, %p222
      %p224 = scmp.ne.s32.totalorder %s212, %s213
      %p225 = scmp.eq.s32.totalorder %s36, 1
      %p226 = por %p224, %p225
      %p228 = scmp.ne.s32.totalorder %s213, %s227
      %p229 = scmp.eq.s32.totalorder %s36, 0
      %p230 = por %p228, %p229
      %s232 = sadd.s32 %s231, 1
      %p235 = scmp.eq.s32.totalorder %s30, 1
      %p236 = scmp.ne.s32.totalorder %s231, %s233
      %p237 = scmp.eq.s32.totalorder %s30, 0
      %p238 = por %p236, %p237
      %p239 = scmp.ne.s32.totalorder %s231, %s233
      %p240 = scmp.eq.s32.totalorder %s35, 1
      %p241 = por %p239, %p240
      %p242 = scmp.ne.s32.totalorder %s233, %s234
      %p243 = scmp.eq.s32.totalorder %s35, 0
      %p244 = por %p242, %p243
      %p245 = scmp.ne.s32.totalorder %s233, %s234
      %p246 = scmp.eq.s32.totalorder %s36, 1
      %p247 = por %p245, %p246
      %p249 = scmp.ne.s32.totalorder %s234, %s248
      %p250 = scmp.eq.s32.totalorder %s36, 0
      %p251 = por %p249, %p250
      %s253 = sadd.s32 %s252, 1
      %p256 = scmp.eq.s32.totalorder %s30, 1
      %p257 = scmp.ne.s32.totalorder %s252, %s254
      %p258 = scmp.eq.s32.totalorder %s30, 0
      %p259 = por %p257, %p258
      %p260 = scmp.ne.s32.totalorder %s252, %s254
      %p261 = scmp.eq.s32.totalorder %s35, 1
      %p262 = por %p260, %p261
      %p263 = scmp.ne.s32.totalorder %s254, %s255
      %p264 = scmp.eq.s32.totalorder %s35, 0
      %p265 = por %p263, %p264
      %p266 = scmp.ne.s32.totalorder %s254, %s255
      %p267 = scmp.eq.s32.totalorder %s36, 1
      %p268 = por %p266, %p267
      %p270 = scmp.ne.s32.totalorder %s255, %s269
      %p271 = scmp.eq.s32.totalorder %s36, 0
      %p272 = por %p270, %p271
      %s273 = ssub.s32 %s30, %s37
      %p274 = scmp.eq.s32.totalorder %s273, 0
      %s276 = sadd.s32 %s275, 1
      %s277 = scalar_select %p274, %s275, %s276
      %p280 = pneg %p274
      %p281 = scmp.eq.s32.totalorder %s30, 1
      %p282 = por %p280, %p281
      %p283 = scmp.ne.s32.totalorder %s275, %s278
      %p284 = scmp.eq.s32.totalorder %s30, 0
      %p285 = por %p283, %p284
      %p286 = scmp.ne.s32.totalorder %s275, %s278
      %p287 = scmp.eq.s32.totalorder %s35, 1
      %p288 = por %p286, %p287
      %p289 = scmp.ne.s32.totalorder %s278, %s279
      %p290 = scmp.eq.s32.totalorder %s35, 0
      %p291 = por %p289, %p290
      %p292 = scmp.ne.s32.totalorder %s278, %s279
      %p293 = scmp.eq.s32.totalorder %s36, 1
      %p294 = por %p292, %p293
      %p296 = scmp.ne.s32.totalorder %s279, %s295
      %p297 = scmp.eq.s32.totalorder %s36, 0
      %p298 = por %p296, %p297
      %p299 = scmp.le.s32.totalorder 1, %s30
      %p300 = scmp.lt.s32.totalorder %s30, 3
      %p301 = pnand %p299, %p300
      %p302 = pneg %p301
      // Predicated region
      $region9: #{tpu_custom_call.1} parent=5 // pred_check
        _
      $region10: #{tpu_custom_call.1} parent=5 // pred_check_branch
        %304 = sbr.rel (%p301) target = $region12
      $region11: #{tpu_custom_call.1} parent=5 // pred_region
        %s305 = ssub.s32 %s30, 1
        // Predicated region
        $region13: #{tpu_custom_call.1} parent=11 // pred_check
          %p306 = pneg %p181
        $region14: #{tpu_custom_call.1} parent=11 // pred_check_branch
          %308 = sbr.rel (%p306) target = $region16
        $region15: #{tpu_custom_call.1} parent=11 // pred_region
          _
        $region16: #{tpu_custom_call.1} parent=11 // pred_fallthru
          _
        // Predicated region
        $region17: #{tpu_custom_call.1} parent=11 // pred_check
          %p309 = pneg %p202
        $region18: #{tpu_custom_call.1} parent=11 // pred_check_branch
          %311 = sbr.rel (%p309) target = $region20
        $region19: #{tpu_custom_call.1} parent=11 // pred_region
          %s313 = ssub.s32 512, 512
          %314 = vsyncadd [#allocation12], %s313
          %s315 = sshll.u32 [#allocation11], 4
          %s316 = int_to_ptr.vmem [resolvable:$true] %s315
          %321 = dma.hbm_to_vmem [thread:$0]  %s6, 512, %s316, [#allocation12], 64, 64, 4
        $region20: #{tpu_custom_call.1} parent=11 // pred_fallthru
          _
        // Predicated region
        $region21: #{tpu_custom_call.1} parent=11 // pred_check
          %p322 = pneg %p223
        $region22: #{tpu_custom_call.1} parent=11 // pred_check_branch
          %324 = sbr.rel (%p322) target = $region24
        $region23: #{tpu_custom_call.1} parent=11 // pred_region
          %s326 = ssub.s32 1024, 1024
          %327 = vsyncadd [#allocation12], %s326
          %s328 = sshll.u32 [#allocation13], 4
          %s329 = int_to_ptr.vmem [resolvable:$true] %s328
          %334 = dma.hbm_to_vmem [thread:$0]  %s7, 1024, %s329, [#allocation12], 64, 64, 4
        $region24: #{tpu_custom_call.1} parent=11 // pred_fallthru
          _
        // Predicated region
        $region25: #{tpu_custom_call.1} parent=11 // pred_check
          %p335 = pneg %p244
        $region26: #{tpu_custom_call.1} parent=11 // pred_check_branch
          %337 = sbr.rel (%p335) target = $region28
        $region27: #{tpu_custom_call.1} parent=11 // pred_region
          %s339 = ssub.s32 1024, 1024
          %340 = vsyncadd [#allocation15], %s339
          %s341 = sshll.u32 [#allocation14], 4
          %s342 = int_to_ptr.vmem [resolvable:$true] %s341
          %347 = dma.hbm_to_vmem [thread:$0]  %s8, 1024, %s342, [#allocation15], 64, 64, 4
        $region28: #{tpu_custom_call.1} parent=11 // pred_fallthru
          _
        // Predicated region
        $region29: #{tpu_custom_call.1} parent=11 // pred_check
          %p348 = pneg %p265
        $region30: #{tpu_custom_call.1} parent=11 // pred_check_branch
          %350 = sbr.rel (%p348) target = $region32
        $region31: #{tpu_custom_call.1} parent=11 // pred_region
          _
        $region32: #{tpu_custom_call.1} parent=11 // pred_fallthru
          _
      $region12: #{tpu_custom_call.1} parent=5 // pred_fallthru
        _
      %p351 = scmp.lt.s32.totalorder %s30, 2
      // Predicated region
      $region33: #{tpu_custom_call.1} parent=5 // pred_check
        %p352 = pneg %p351
      $region34: #{tpu_custom_call.1} parent=5 // pred_check_branch
        %354 = sbr.rel (%p352) target = $region36
      $region35: #{tpu_custom_call.1} parent=5 // pred_region
        // Predicated region
        $region37: #{tpu_custom_call.1} parent=35 // pred_check
          %p355 = pneg %p50
        $region38: #{tpu_custom_call.1} parent=35 // pred_check_branch
          %357 = sbr.rel (%p355) target = $region40
        $region39: #{tpu_custom_call.1} parent=35 // pred_region
          %s358 = sand.u32 %s40, 1
          %s359 = scalar_lea.sflag [#allocation3], %s358
          %s360 = sand.u32 %s40, 1
          %s361 = smul.addr %s360, 8
          %s362 = scalar_lea.vmem [#allocation2], %s361
          %s364 = ssub.s32 128, 128
          %365 = vsyncadd %s359, %s364
          %s366 = smul.addr %s30, 128
          %s367 = scalar_lea.hbm %s0, %s366
          %s369 = sshll.u32 %s362, 4
          %s370 = int_to_ptr.vmem [resolvable:$true] %s369
          %372 = dma.hbm_to_vmem [thread:$0]  %s367, 128, %s370, %s359
        $region40: #{tpu_custom_call.1} parent=35 // pred_fallthru
          _
        // Predicated region
        $region41: #{tpu_custom_call.1} parent=35 // pred_check
          %p373 = pneg %p76
        $region42: #{tpu_custom_call.1} parent=35 // pred_check_branch
          %375 = sbr.rel (%p373) target = $region44
        $region43: #{tpu_custom_call.1} parent=35 // pred_region
          %s376 = sand.u32 %s30, 1
          %s377 = scalar_lea.sflag [#allocation6], %s376
          %s378 = sand.u32 %s66, 1
          %s379 = smul.addr %s378, 8
          %s380 = scalar_lea.vmem [#allocation5], %s379
          %s382 = ssub.s32 128, 128
          %383 = vsyncadd %s377, %s382
          %s384 = smul.addr %s30, 128
          %s385 = scalar_lea.hbm %s1, %s384
          %s387 = sshll.u32 %s380, 4
          %s388 = int_to_ptr.vmem [resolvable:$true] %s387
          %390 = dma.hbm_to_vmem [thread:$0]  %s385, 128, %s388, %s377
        $region44: #{tpu_custom_call.1} parent=35 // pred_fallthru
          _
        // Predicated region
        $region45: #{tpu_custom_call.1} parent=35 // pred_check
          %p391 = pneg %p102
        $region46: #{tpu_custom_call.1} parent=35 // pred_check_branch
          %393 = sbr.rel (%p391) target = $region48
        $region47: #{tpu_custom_call.1} parent=35 // pred_region
          %s394 = sand.u32 %s30, 1
          %s395 = scalar_lea.sflag [#allocation6], %s394
          %s396 = sand.u32 %s92, 1
          %s397 = smul.addr %s396, 8
          %s398 = scalar_lea.vmem [#allocation7], %s397
          %s400 = ssub.s32 128, 128
          %401 = vsyncadd %s395, %s400
          %s402 = smul.addr %s30, 128
          %s403 = scalar_lea.hbm %s2, %s402
          %s405 = sshll.u32 %s398, 4
          %s406 = int_to_ptr.vmem [resolvable:$true] %s405
          %408 = dma.hbm_to_vmem [thread:$0]  %s403, 128, %s406, %s395
        $region48: #{tpu_custom_call.1} parent=35 // pred_fallthru
          _
        // Predicated region
        $region49: #{tpu_custom_call.1} parent=35 // pred_check
          %p409 = pneg %p128
        $region50: #{tpu_custom_call.1} parent=35 // pred_check_branch
          %411 = sbr.rel (%p409) target = $region52
        $region51: #{tpu_custom_call.1} parent=35 // pred_region
          %s412 = sand.u32 %s30, 1
          %s413 = scalar_lea.sflag [#allocation9], %s412
          %s414 = sand.u32 %s118, 1
          %s415 = smul.addr %s414, 8
          %s416 = scalar_lea.vmem [#allocation8], %s415
          %s418 = ssub.s32 128, 128
          %419 = vsyncadd %s413, %s418
          %s420 = smul.addr %s30, 128
          %s421 = scalar_lea.hbm %s3, %s420
          %s423 = sshll.u32 %s416, 4
          %s424 = int_to_ptr.vmem [resolvable:$true] %s423
          %426 = dma.hbm_to_vmem [thread:$0]  %s421, 128, %s424, %s413
        $region52: #{tpu_custom_call.1} parent=35 // pred_fallthru
          _
        // Predicated region
        $region53: #{tpu_custom_call.1} parent=35 // pred_check
          %p427 = pneg %p154
        $region54: #{tpu_custom_call.1} parent=35 // pred_check_branch
          %429 = sbr.rel (%p427) target = $region56
        $region55: #{tpu_custom_call.1} parent=35 // pred_region
          %s430 = sand.u32 %s30, 1
          %s431 = scalar_lea.sflag [#allocation9], %s430
          %s432 = sand.u32 %s144, 1
          %s433 = smul.addr %s432, 8
          %s434 = scalar_lea.vmem [#allocation10], %s433
          %s436 = ssub.s32 128, 128
          %437 = vsyncadd %s431, %s436
          %s438 = smul.addr %s30, 128
          %s439 = scalar_lea.hbm %s4, %s438
          %s441 = sshll.u32 %s434, 4
          %s442 = int_to_ptr.vmem [resolvable:$true] %s441
          %444 = dma.hbm_to_vmem [thread:$0]  %s439, 128, %s442, %s431
        $region56: #{tpu_custom_call.1} parent=35 // pred_fallthru
          _
      $region36: #{tpu_custom_call.1} parent=5 // pred_fallthru
        _
      %p445 = scmp.le.s32.totalorder 1, %s30
      %p446 = scmp.lt.s32.totalorder %s30, 3
      %p447 = pnand %p445, %p446
      %p448 = pneg %p447
      // Predicated region
      $region57: #{tpu_custom_call.1} parent=5 // pred_check
        _
      $region58: #{tpu_custom_call.1} parent=5 // pred_check_branch
        %450 = sbr.rel (%p447) target = $region60
      $region59: #{tpu_custom_call.1} parent=5 // pred_region
        %s451 = ssub.s32 %s30, 1
        %s452 = sand.u32 %s43, 1
        %s453 = scalar_lea.sflag [#allocation3], %s452
        %s454 = sand.u32 %s43, 1
        %s455 = smul.addr %s454, 8
        %s456 = scalar_lea.vmem [#allocation2], %s455
        // Predicated region
        $region61: #{tpu_custom_call.1} parent=59 // pred_check
          %p457 = pneg %p56
        $region62: #{tpu_custom_call.1} parent=59 // pred_check_branch
          %459 = sbr.rel (%p457) target = $region64
        $region63: #{tpu_custom_call.1} parent=59 // pred_region
          %460 = dma.done %s453, 128
        $region64: #{tpu_custom_call.1} parent=59 // pred_fallthru
          _
        %s461 = sand.u32 %s35, 1
        %s462 = scalar_lea.sflag [#allocation6], %s461
        %s463 = sand.u32 %s69, 1
        %s464 = smul.addr %s463, 8
        %s465 = scalar_lea.vmem [#allocation5], %s464
        // Predicated region
        $region65: #{tpu_custom_call.1} parent=59 // pred_check
          %p466 = pneg %p82
        $region66: #{tpu_custom_call.1} parent=59 // pred_check_branch
          %468 = sbr.rel (%p466) target = $region68
        $region67: #{tpu_custom_call.1} parent=59 // pred_region
          %469 = dma.done %s462, 128
        $region68: #{tpu_custom_call.1} parent=59 // pred_fallthru
          _
        %s470 = sand.u32 %s35, 1
        %s471 = scalar_lea.sflag [#allocation6], %s470
        %s472 = sand.u32 %s95, 1
        %s473 = smul.addr %s472, 8
        %s474 = scalar_lea.vmem [#allocation7], %s473
        // Predicated region
        $region69: #{tpu_custom_call.1} parent=59 // pred_check
          %p475 = pneg %p108
        $region70: #{tpu_custom_call.1} parent=59 // pred_check_branch
          %477 = sbr.rel (%p475) target = $region72
        $region71: #{tpu_custom_call.1} parent=59 // pred_region
          %478 = dma.done %s471, 128
        $region72: #{tpu_custom_call.1} parent=59 // pred_fallthru
          _
        %s479 = sand.u32 %s35, 1
        %s480 = scalar_lea.sflag [#allocation9], %s479
        %s481 = sand.u32 %s121, 1
        %s482 = smul.addr %s481, 8
        %s483 = scalar_lea.vmem [#allocation8], %s482
        // Predicated region
        $region73: #{tpu_custom_call.1} parent=59 // pred_check
          %p484 = pneg %p134
        $region74: #{tpu_custom_call.1} parent=59 // pred_check_branch
          %486 = sbr.rel (%p484) target = $region76
        $region75: #{tpu_custom_call.1} parent=59 // pred_region
          %487 = dma.done %s480, 128
        $region76: #{tpu_custom_call.1} parent=59 // pred_fallthru
          _
        %s488 = sand.u32 %s35, 1
        %s489 = scalar_lea.sflag [#allocation9], %s488
        %s490 = sand.u32 %s147, 1
        %s491 = smul.addr %s490, 8
        %s492 = scalar_lea.vmem [#allocation10], %s491
        // Predicated region
        $region77: #{tpu_custom_call.1} parent=59 // pred_check
          %p493 = pneg %p160
        $region78: #{tpu_custom_call.1} parent=59 // pred_check_branch
          %495 = sbr.rel (%p493) target = $region80
        $region79: #{tpu_custom_call.1} parent=59 // pred_region
          %496 = dma.done %s489, 128
        $region80: #{tpu_custom_call.1} parent=59 // pred_fallthru
          _
        // Predicated region
        $region81: #{tpu_custom_call.1} parent=59 // pred_check
          %p497 = pneg %p202
        $region82: #{tpu_custom_call.1} parent=59 // pred_check_branch
          %499 = sbr.rel (%p497) target = $region84
        $region83: #{tpu_custom_call.1} parent=59 // pred_region
          %500 = dma.done [#allocation12], 512
        $region84: #{tpu_custom_call.1} parent=59 // pred_fallthru
          _
        // Predicated region
        $region85: #{tpu_custom_call.1} parent=59 // pred_check
          %p501 = pneg %p223
        $region86: #{tpu_custom_call.1} parent=59 // pred_check_branch
          %503 = sbr.rel (%p501) target = $region88
        $region87: #{tpu_custom_call.1} parent=59 // pred_region
          %504 = dma.done [#allocation12], 1024
        $region88: #{tpu_custom_call.1} parent=59 // pred_fallthru
          _
        // Predicated region
        $region89: #{tpu_custom_call.1} parent=59 // pred_check
          %p505 = pneg %p244
        $region90: #{tpu_custom_call.1} parent=59 // pred_check_branch
          %507 = sbr.rel (%p505) target = $region92
        $region91: #{tpu_custom_call.1} parent=59 // pred_region
          %508 = dma.done [#allocation15], 1024
        $region92: #{tpu_custom_call.1} parent=59 // pred_fallthru
          _
        %s509 = sand.u32 %s43, 1
        %s510 = scalar_lea.sflag [#allocation3], %s509
        %s511 = sand.u32 %s43, 1
        %s512 = smul.addr %s511, 8
        %s513 = scalar_lea.vmem [#allocation2], %s512
        %p514 = pneg %p56
        %p515 = pneg %p53
        %s516 = sand.u32 %s35, 1
        %s517 = scalar_lea.sflag [#allocation6], %s516
        %s518 = sand.u32 %s69, 1
        %s519 = smul.addr %s518, 8
        %s520 = scalar_lea.vmem [#allocation5], %s519
        %p521 = pneg %p82
        %p522 = pneg %p79
        %s523 = sand.u32 %s35, 1
        %s524 = scalar_lea.sflag [#allocation6], %s523
        %s525 = sand.u32 %s95, 1
        %s526 = smul.addr %s525, 8
        %s527 = scalar_lea.vmem [#allocation7], %s526
        %p528 = pneg %p108
        %p529 = pneg %p105
        %s530 = sand.u32 %s35, 1
        %s531 = scalar_lea.sflag [#allocation9], %s530
        %s532 = sand.u32 %s121, 1
        %s533 = smul.addr %s532, 8
        %s534 = scalar_lea.vmem [#allocation8], %s533
        %p535 = pneg %p134
        %p536 = pneg %p131
        %s537 = sand.u32 %s35, 1
        %s538 = scalar_lea.sflag [#allocation9], %s537
        %s539 = sand.u32 %s147, 1
        %s540 = smul.addr %s539, 8
        %s541 = scalar_lea.vmem [#allocation10], %s540
        %p542 = pneg %p160
        %p543 = pneg %p157
        %p544 = pneg %p181
        %p545 = pneg %p178
        %p546 = pneg %p202
        %p547 = pneg %p199
        %p548 = pneg %p223
        %p549 = pneg %p220
        %p550 = pneg %p244
        %p551 = pneg %p241
        %p552 = pneg %p265
        %p553 = pneg %p262
        %p554 = pneg %p291
        %p555 = pneg %p288
        %s556 = sand.u32 %s278, 1
        %s557 = scalar_lea.sflag [#allocation4], %s556
        %s558 = sand.u32 %s278, 1
        %s559 = smul.addr %s558, 4
        %s560 = scalar_lea.vmem [#allocation16], %s559
        %v562 = vld [vmem:[%s465] sm:$0xff]
        %v563 = vpack.c.bf16 %v562, %v562
        %v564 = vld [vmem:[%s5] sm:$0xf]
        %v565 = vld [vmem:[%s5 + $0x4] sm:$0xf]
        %v566 = vld [vmem:[%s5 + $0x8] sm:$0xf]
        %v567 = vld [vmem:[%s5 + $0xc] sm:$0xf]
        %v568 = vld [vmem:[%s474] sm:$0xff]
        %v569 = vpack.c.bf16 %v568, %v568
        %v570 = vld [vmem:[#allocation11] sm:$0xf]
        %v571 = vld [vmem:[#allocation11 + $0x4] sm:$0xf]
        %v572 = vld [vmem:[#allocation11 + $0x8] sm:$0xf]
        %v573 = vld [vmem:[#allocation11 + $0xc] sm:$0xf]
        %v574 = vld [vmem:[#allocation11 + $0x10] sm:$0xf]
        %v575 = vld [vmem:[#allocation11 + $0x14] sm:$0xf]
        %v576 = vld [vmem:[#allocation11 + $0x18] sm:$0xf]
        %v577 = vld [vmem:[#allocation11 + $0x1c] sm:$0xf]
        %v586 = vunpack.c.l.b16 %v570
        %v587 = vunpack.c.l.b16 %v571
        %v588 = vunpack.c.l.b16 %v572
        %v589 = vunpack.c.l.b16 %v573
        %v590 = vunpack.c.l.b16 %v574
        %v591 = vunpack.c.l.b16 %v575
        %v592 = vunpack.c.l.b16 %v576
        %v593 = vunpack.c.l.b16 %v577
        %v594 = vpack.c.b16 %v587, %v586
        %v595 = vpack.c.b16 %v589, %v588
        %v596 = vpack.c.b16 %v591, %v590
        %v597 = vpack.c.b16 %v593, %v592
        %vm602 = vcmask 523264
        %v604 = vsel %vm602, %v569, 0
        %606 = vmatprep.subr.bf16.mxu0 0
        %607 = vmatpush1.bf16.msra.mxu0 %v594
        %608 = vmatprep.subr.bf16.mxu0 0
        %609 = vmatpush1.bf16.msra.mxu0 %v595
        %610 = vmatprep.subr.bf16.mxu0 0
        %611 = vmatpush1.bf16.msra.mxu0 %v596
        %612 = vmatprep.subr.bf16.mxu0 0
        %613 = vmatpush1.bf16.msra.mxu0 %v597
        %614 = vmatprep.subr.bf16.mxu0 0
        %615 = vmatpush1.bf16.msra.mxu0 0
        %616 = vmatprep.subr.bf16.mxu0 0
        %617 = vmatpush1.bf16.msra.mxu0 0
        %618 = vmatprep.subr.bf16.mxu0 0
        %619 = vmatpush1.bf16.msra.mxu0 0
        %620 = vmatprep.subr.bf16.mxu0 0
        %621 = vmatpush1.bf16.msra.mxu0 0
        %622 = vmatprep.subr.bf16.mxu0 0
        %623 = vmatpush1.bf16.msra.mxu0 0
        %624 = vmatprep.subr.bf16.mxu0 0
        %625 = vmatpush1.bf16.msra.mxu0 0
        %626 = vmatprep.subr.bf16.mxu0 0
        %627 = vmatpush1.bf16.msra.mxu0 0
        %628 = vmatprep.subr.bf16.mxu0 0
        %629 = vmatpush1.bf16.msra.mxu0 0
        %630 = vmatprep.subr.bf16.mxu0 0
        %631 = vmatpush1.bf16.msra.mxu0 0
        %632 = vmatprep.subr.bf16.mxu0 0
        %633 = vmatpush1.bf16.msra.mxu0 0
        %634 = vmatprep.subr.bf16.mxu0 0
        %635 = vmatpush1.bf16.msra.mxu0 0
        %636 = vmatprep.subr.bf16.mxu0 0
        %637 = vmatpush1.bf16.msra.mxu0 0
        %638 = vmatprep.mubr.bf16.mxu0 0
        %639 = vmatmul.mubr.bf16.gmra.mrb[0].mxu0 %v604
        %v640 = vpop.f32.mrb[0].mxu0
        %v641 = vadd.f32 0.0, %v640
        %v642 = vpop.f32.mrb[0].mxu0
        %v643 = vpop.f32.mrb[0].mxu0
        %v644 = vpop.f32.mrb[0].mxu0
        %645 = vdwg.mxu0
        %v650 = vunpack.c.l.b16 %v564
        %v651 = vunpack.c.l.b16 %v565
        %v652 = vunpack.c.l.b16 %v566
        %v653 = vunpack.c.l.b16 %v567
        %v654 = vpack.c.b16 %v651, %v650
        %v655 = vpack.c.b16 %v653, %v652
        %vm658 = vcmask 261120
        %v660 = vsel %vm658, %v563, 0
        %662 = vmatprep.subr.bf16.mxu0 0
        %663 = vmatpush1.bf16.msra.mxu0 %v654
        %664 = vmatprep.subr.bf16.mxu0 0
        %665 = vmatpush1.bf16.msra.mxu0 %v655
        %666 = vmatprep.subr.bf16.mxu0 0
        %667 = vmatpush1.bf16.msra.mxu0 0
        %668 = vmatprep.subr.bf16.mxu0 0
        %669 = vmatpush1.bf16.msra.mxu0 0
        %670 = vmatprep.subr.bf16.mxu0 0
        %671 = vmatpush1.bf16.msra.mxu0 0
        %672 = vmatprep.subr.bf16.mxu0 0
        %673 = vmatpush1.bf16.msra.mxu0 0
        %674 = vmatprep.subr.bf16.mxu0 0
        %675 = vmatpush1.bf16.msra.mxu0 0
        %676 = vmatprep.subr.bf16.mxu0 0
        %677 = vmatpush1.bf16.msra.mxu0 0
        %678 = vmatprep.subr.bf16.mxu0 0
        %679 = vmatpush1.bf16.msra.mxu0 0
        %680 = vmatprep.subr.bf16.mxu0 0
        %681 = vmatpush1.bf16.msra.mxu0 0
        %682 = vmatprep.subr.bf16.mxu0 0
        %683 = vmatpush1.bf16.msra.mxu0 0
        %684 = vmatprep.subr.bf16.mxu0 0
        %685 = vmatpush1.bf16.msra.mxu0 0
        %686 = vmatprep.subr.bf16.mxu0 0
        %687 = vmatpush1.bf16.msra.mxu0 0
        %688 = vmatprep.subr.bf16.mxu0 0
        %689 = vmatpush1.bf16.msra.mxu0 0
        %690 = vmatprep.subr.bf16.mxu0 0
        %691 = vmatpush1.bf16.msra.mxu0 0
        %692 = vmatprep.subr.bf16.mxu0 0
        %693 = vmatpush1.bf16.msra.mxu0 0
        %694 = vmatprep.mubr.bf16.mxu0 0
        %695 = vmatmul.mubr.bf16.gmra.mrb[0].mxu0 %v660
        %v696 = vpop.f32.mrb[0].mxu0
        %v697 = vadd.f32 %v641, %v696
        %v698 = vpop.f32.mrb[0].mxu0
        %v699 = vpop.f32.mrb[0].mxu0
        %v700 = vpop.f32.mrb[0].mxu0
        %701 = vdwg.mxu0
        %v702 = vld [vmem:[%s9] sm:$0x1]
        %v703 = vlaneseq
        %v704 = vshrl.u32 %v703, 7
        %v705 = vsub.s32 0, %v704
        %v706 = vrot.slane %v702, %v705
        %v707 = vadd.f32 %v697, %v706
        %v708 = vld [vmem:[%s483] sm:$0xff]
        %v709 = vld [vmem:[%s492] sm:$0xff]
        %v710 = vadd.f32 %v708, %v709
        %v711 = vpack.c.bf16 %v710, %v710
        %v712 = vld [vmem:[#allocation13] sm:$0xf]
        %v713 = vld [vmem:[#allocation13 + $0x4] sm:$0xf]
        %v714 = vld [vmem:[#allocation13 + $0x8] sm:$0xf]
        %v715 = vld [vmem:[#allocation13 + $0xc] sm:$0xf]
        %v716 = vld [vmem:[#allocation13 + $0x10] sm:$0xf]
        %v717 = vld [vmem:[#allocation13 + $0x14] sm:$0xf]
        %v718 = vld [vmem:[#allocation13 + $0x18] sm:$0xf]
        %v719 = vld [vmem:[#allocation13 + $0x1c] sm:$0xf]
        %v720 = vld [vmem:[#allocation13 + $0x20] sm:$0xf]
        %v721 = vld [vmem:[#allocation13 + $0x24] sm:$0xf]
        %v722 = vld [vmem:[#allocation13 + $0x28] sm:$0xf]
        %v723 = vld [vmem:[#allocation13 + $0x2c] sm:$0xf]
        %v724 = vld [vmem:[#allocation13 + $0x30] sm:$0xf]
        %v725 = vld [vmem:[#allocation13 + $0x34] sm:$0xf]
        %v726 = vld [vmem:[#allocation13 + $0x38] sm:$0xf]
        %v727 = vld [vmem:[#allocation13 + $0x3c] sm:$0xf]
        %v744 = vunpack.c.l.b16 %v712
        %v745 = vunpack.c.l.b16 %v713
        %v746 = vunpack.c.l.b16 %v714
        %v747 = vunpack.c.l.b16 %v715
        %v748 = vunpack.c.l.b16 %v716
        %v749 = vunpack.c.l.b16 %v717
        %v750 = vunpack.c.l.b16 %v718
        %v751 = vunpack.c.l.b16 %v719
        %v752 = vunpack.c.l.b16 %v720
        %v753 = vunpack.c.l.b16 %v721
        %v754 = vunpack.c.l.b16 %v722
        %v755 = vunpack.c.l.b16 %v723
        %v756 = vunpack.c.l.b16 %v724
        %v757 = vunpack.c.l.b16 %v725
        %v758 = vunpack.c.l.b16 %v726
        %v759 = vunpack.c.l.b16 %v727
        %v760 = vpack.c.b16 %v745, %v744
        %v761 = vpack.c.b16 %v747, %v746
        %v762 = vpack.c.b16 %v749, %v748
        %v763 = vpack.c.b16 %v751, %v750
        %v764 = vpack.c.b16 %v753, %v752
        %v765 = vpack.c.b16 %v755, %v754
        %v766 = vpack.c.b16 %v757, %v756
        %v767 = vpack.c.b16 %v759, %v758
        %776 = vmatprep.subr.bf16.mxu0 0
        %777 = vmatpush1.bf16.msra.mxu0 %v760
        %778 = vmatprep.subr.bf16.mxu0 0
        %779 = vmatpush1.bf16.msra.mxu0 %v761
        %780 = vmatprep.subr.bf16.mxu0 0
        %781 = vmatpush1.bf16.msra.mxu0 %v762
        %782 = vmatprep.subr.bf16.mxu0 0
        %783 = vmatpush1.bf16.msra.mxu0 %v763
        %784 = vmatprep.subr.bf16.mxu0 0
        %785 = vmatpush1.bf16.msra.mxu0 %v764
        %786 = vmatprep.subr.bf16.mxu0 0
        %787 = vmatpush1.bf16.msra.mxu0 %v765
        %788 = vmatprep.subr.bf16.mxu0 0
        %789 = vmatpush1.bf16.msra.mxu0 %v766
        %790 = vmatprep.subr.bf16.mxu0 0
        %791 = vmatpush1.bf16.msra.mxu0 %v767
        %792 = vmatprep.subr.bf16.mxu0 0
        %793 = vmatpush1.bf16.msra.mxu0 0
        %794 = vmatprep.subr.bf16.mxu0 0
        %795 = vmatpush1.bf16.msra.mxu0 0
        %796 = vmatprep.subr.bf16.mxu0 0
        %797 = vmatpush1.bf16.msra.mxu0 0
        %798 = vmatprep.subr.bf16.mxu0 0
        %799 = vmatpush1.bf16.msra.mxu0 0
        %800 = vmatprep.subr.bf16.mxu0 0
        %801 = vmatpush1.bf16.msra.mxu0 0
        %802 = vmatprep.subr.bf16.mxu0 0
        %803 = vmatpush1.bf16.msra.mxu0 0
        %804 = vmatprep.subr.bf16.mxu0 0
        %805 = vmatpush1.bf16.msra.mxu0 0
        %806 = vmatprep.subr.bf16.mxu0 0
        %807 = vmatpush1.bf16.msra.mxu0 0
        %808 = vmatprep.mubr.bf16.mxu0 0
        %809 = vmatmul.mubr.bf16.gmra.mrb[0].mxu0 %v711
        %v810 = vpop.f32.mrb[0].mxu0
        %v811 = vadd.f32 0.0, %v810
        %v812 = vpop.f32.mrb[0].mxu0
        %v813 = vpop.f32.mrb[0].mxu0
        %v814 = vpop.f32.mrb[0].mxu0
        %815 = vdwg.mxu0
        %v816 = vld [vmem:[%s456] sm:$0xff]
        %v817 = vmul.f32 %v816, %v707
        %v818 = vadd.f32 %v817, %v811
        %v819 = vpack.c.bf16 %v818, %v818
        %v820 = vld [vmem:[#allocation14] sm:$0xf]
        %v821 = vld [vmem:[#allocation14 + $0x4] sm:$0xf]
        %v822 = vld [vmem:[#allocation14 + $0x8] sm:$0xf]
        %v823 = vld [vmem:[#allocation14 + $0xc] sm:$0xf]
        %v824 = vld [vmem:[#allocation14 + $0x10] sm:$0xf]
        %v825 = vld [vmem:[#allocation14 + $0x14] sm:$0xf]
        %v826 = vld [vmem:[#allocation14 + $0x18] sm:$0xf]
        %v827 = vld [vmem:[#allocation14 + $0x1c] sm:$0xf]
        %v828 = vld [vmem:[#allocation14 + $0x20] sm:$0xf]
        %v829 = vld [vmem:[#allocation14 + $0x24] sm:$0xf]
        %v830 = vld [vmem:[#allocation14 + $0x28] sm:$0xf]
        %v831 = vld [vmem:[#allocation14 + $0x2c] sm:$0xf]
        %v832 = vld [vmem:[#allocation14 + $0x30] sm:$0xf]
        %v833 = vld [vmem:[#allocation14 + $0x34] sm:$0xf]
        %v834 = vld [vmem:[#allocation14 + $0x38] sm:$0xf]
        %v835 = vld [vmem:[#allocation14 + $0x3c] sm:$0xf]
        %v836 = vld [vmem:[%s9 + $0x1] sm:$0x1]
        %v837 = vlaneseq
        %v838 = vshrl.u32 %v837, 7
        %v839 = vsub.s32 0, %v838
        %v840 = vrot.slane %v836, %v839
        %v857 = vunpack.c.l.b16 %v820
        %v858 = vunpack.c.l.b16 %v821
        %v859 = vunpack.c.l.b16 %v822
        %v860 = vunpack.c.l.b16 %v823
        %v861 = vunpack.c.l.b16 %v824
        %v862 = vunpack.c.l.b16 %v825
        %v863 = vunpack.c.l.b16 %v826
        %v864 = vunpack.c.l.b16 %v827
        %v865 = vunpack.c.l.b16 %v828
        %v866 = vunpack.c.l.b16 %v829
        %v867 = vunpack.c.l.b16 %v830
        %v868 = vunpack.c.l.b16 %v831
        %v869 = vunpack.c.l.b16 %v832
        %v870 = vunpack.c.l.b16 %v833
        %v871 = vunpack.c.l.b16 %v834
        %v872 = vunpack.c.l.b16 %v835
        %v873 = vpack.c.b16 %v858, %v857
        %v874 = vpack.c.b16 %v860, %v859
        %v875 = vpack.c.b16 %v862, %v861
        %v876 = vpack.c.b16 %v864, %v863
        %v877 = vpack.c.b16 %v866, %v865
        %v878 = vpack.c.b16 %v868, %v867
        %v879 = vpack.c.b16 %v870, %v869
        %v880 = vpack.c.b16 %v872, %v871
        %889 = vmatprep.subr.bf16.mxu0 0
        %890 = vmatpush1.bf16.msra.mxu0 %v873
        %891 = vmatprep.subr.bf16.mxu0 0
        %892 = vmatpush1.bf16.msra.mxu0 %v874
        %893 = vmatprep.subr.bf16.mxu0 0
        %894 = vmatpush1.bf16.msra.mxu0 %v875
        %895 = vmatprep.subr.bf16.mxu0 0
        %896 = vmatpush1.bf16.msra.mxu0 %v876
        %897 = vmatprep.subr.bf16.mxu0 0
        %898 = vmatpush1.bf16.msra.mxu0 %v877
        %899 = vmatprep.subr.bf16.mxu0 0
        %900 = vmatpush1.bf16.msra.mxu0 %v878
        %901 = vmatprep.subr.bf16.mxu0 0
        %902 = vmatpush1.bf16.msra.mxu0 %v879
        %903 = vmatprep.subr.bf16.mxu0 0
        %904 = vmatpush1.bf16.msra.mxu0 %v880
        %905 = vmatprep.subr.bf16.mxu0 0
        %906 = vmatpush1.bf16.msra.mxu0 0
        %907 = vmatprep.subr.bf16.mxu0 0
        %908 = vmatpush1.bf16.msra.mxu0 0
        %909 = vmatprep.subr.bf16.mxu0 0
        %910 = vmatpush1.bf16.msra.mxu0 0
        %911 = vmatprep.subr.bf16.mxu0 0
        %912 = vmatpush1.bf16.msra.mxu0 0
        %913 = vmatprep.subr.bf16.mxu0 0
        %914 = vmatpush1.bf16.msra.mxu0 0
        %915 = vmatprep.subr.bf16.mxu0 0
        %916 = vmatpush1.bf16.msra.mxu0 0
        %917 = vmatprep.subr.bf16.mxu0 0
        %918 = vmatpush1.bf16.msra.mxu0 0
        %919 = vmatprep.subr.bf16.mxu0 0
        %920 = vmatpush1.bf16.msra.mxu0 0
        %921 = vmatprep.mubr.bf16.mxu0 0
        %922 = vmatmul.mubr.bf16.gmra.mrb[0].mxu0 %v819
        %v923 = vpop.f32.mrb[0].mxu0
        %v924 = vadd.f32 %v840, %v923
        %v925 = vpop.f32.mrb[0].mxu0
        %v926 = vpop.f32.mrb[0].mxu0
        %v927 = vpop.f32.mrb[0].mxu0
        %928 = vdwg.mxu0
        %v929 = vpack.c.bf16 %v924, %v924
        %930 = vst [vmem:[%s560] sm:$0xf] %v929
        %s931 = sand.u32 %s278, 1
        %s932 = scalar_lea.sflag [#allocation4], %s931
        %s933 = sand.u32 %s278, 1
        %s934 = smul.addr %s933, 4
        %s935 = scalar_lea.vmem [#allocation16], %s934
        // Predicated region
        $region93: #{tpu_custom_call.1} parent=59 // pred_check
          %p936 = pneg %p288
        $region94: #{tpu_custom_call.1} parent=59 // pred_check_branch
          %938 = sbr.rel (%p936) target = $region96
        $region95: #{tpu_custom_call.1} parent=59 // pred_region
          %s940 = ssub.s32 64, 64
          %941 = vsyncadd %s932, %s940
          %s942 = smul.addr %s35, 64
          %s943 = scalar_lea.hbm %s10, %s942
          %s945 = sshll.u32 %s935, 4
          %s946 = int_to_ptr.vmem [resolvable:$true] %s945
          %948 = dma.vmem_to_hbm [thread:$0]  %s946, 64, %s943, %s932
        $region96: #{tpu_custom_call.1} parent=59 // pred_fallthru
          _
      $region60: #{tpu_custom_call.1} parent=5 // pred_fallthru
        _
      %p949 = scmp.le.s32.totalorder 2, %s30
      // Predicated region
      $region97: #{tpu_custom_call.1} parent=5 // pred_check
        %p950 = pneg %p949
      $region98: #{tpu_custom_call.1} parent=5 // pred_check_branch
        %952 = sbr.rel (%p950) target = $region100
      $region99: #{tpu_custom_call.1} parent=5 // pred_region
        %s953 = ssub.s32 %s30, 2
        // Predicated region
        $region101: #{tpu_custom_call.1} parent=99 // pred_check
          %p954 = pneg %p294
        $region102: #{tpu_custom_call.1} parent=99 // pred_check_branch
          %956 = sbr.rel (%p954) target = $region104
        $region103: #{tpu_custom_call.1} parent=99 // pred_region
          %s957 = sand.u32 %s279, 1
          %s958 = scalar_lea.sflag [#allocation4], %s957
          %s959 = sand.u32 %s279, 1
          %s960 = smul.addr %s959, 4
          %s961 = scalar_lea.vmem [#allocation16], %s960
          %962 = dma.done %s958, 64
        $region104: #{tpu_custom_call.1} parent=99 // pred_fallthru
          _
      $region100: #{tpu_custom_call.1} parent=5 // pred_fallthru
        _
    $region6: #{tpu_custom_call.1} parent=1 // loop_footer
      %s34 = sadd.s32 1, %s30
    $region7: #{tpu_custom_call.1} parent=1 // loop_footer_branch
      %29 = sbr.rel target = $region3
    $region8: #{tpu_custom_call.1} parent=1 // loop_exit
      _
    %963 = vsyncpa [#allocation3], 1
    %s964 = scalar_lea.sflag [#allocation3], 1
    %965 = vsyncpa %s964, 1
    %966 = vsyncpa [#allocation6], 1
    %s967 = scalar_lea.sflag [#allocation6], 1
    %968 = vsyncpa %s967, 1
    %969 = vsyncpa [#allocation9], 1
    %s970 = scalar_lea.sflag [#allocation9], 1
    %971 = vsyncpa %s970, 1
    %972 = vsyncpa [#allocation12], 1
    %973 = vsyncpa [#allocation15], 1
    %974 = vsyncpa [#allocation4], 1
    %s975 = scalar_lea.sflag [#allocation4], 1
    %976 = vsyncpa %s975, 1

</llo_original>
